<compile_context>
chip_gen: v7x
topology: tpu7x:2x2x1
jax: 0.10.0
libtpu: 0.0.40
codegen_flags: <defaults>
</compile_context>

<pallas_src>
import functools

import numpy as np
import jax
import jax.numpy as jnp
from jax.experimental import pallas as pl
from jax.experimental.pallas import tpu as pltpu


def _concat_conv_kernel(mask_ref, x_ref, w_ref, b_ref, out_ref, *, W):
    # mask_ref: (9, HW)        per-tap zero-padding validity masks (1.0 / 0.0)
    # x_ref:    (N, C, HW)     whole batch; channels on sublanes, H*W on lanes
    # w_ref:    (9, C, C)      w_ref[tap, co, ci] = weight[co, ci, dh, dw]
    # b_ref:    (C, 1)         conv bias (broadcast over lanes)
    # out_ref:  (N, 2C, HW)    [x | relu(conv(x)+b)] stacked along channels
    N, C, HW = x_ref.shape

    masks = mask_ref[...]                          # (9, HW) f32
    b = b_ref[...].astype(jnp.float32)             # (C, 1)

    for n in range(N):                             # N is tiny and static
        xn_raw = x_ref[n]                          # (C, HW)
        # Pass-through half of the concat: contiguous, lane-dense slab copy.
        out_ref[n, 0:C, :] = xn_raw

        xn = xn_raw.astype(jnp.float32)

        # 3x3 conv: 9 taps. Each tap = lane roll (XLU) + zero-pad mask (VPU)
        # + a small (C, C) @ (C, HW) matmul on the MXU.
        acc = None
        for dh in range(3):
            for dw in range(3):
                tap = dh * 3 + dw
                off = (dh - 1) * W + (dw - 1)      # flat-index offset of tap
                if off == 0:
                    shifted = xn                   # center tap: no shift/mask
                else:
                    # shifted[ci, p] = x[ci, p + off] at valid positions;
                    # wrapped lanes are exactly the zero-padding positions
                    # and get masked to 0.
                    shifted = pltpu.roll(xn, shift=(-off) % HW, axis=1)
                    shifted = shifted * masks[tap:tap + 1, :]
                w_tap = w_ref[tap].astype(jnp.float32)          # (Cout, Cin)
                contrib = jnp.dot(w_tap, shifted,
                                  preferred_element_type=jnp.float32)
                acc = contrib if acc is None else acc + contrib

        y = jnp.maximum(acc + b, 0.0)
        out_ref[n, C:2 * C, :] = y.astype(out_ref.dtype)


def concat_block(x_nchw, w_hwio, b):
    """ConcatBlock forward.  x_nchw: (N, C, H, W) -> (N, 2C, H, W)."""
    N, C, H, W = x_nchw.shape
    assert w_hwio.shape == (3, 3, C, C)
    assert b.shape == (C,)
    HW = H * W

    # Free, layout-preserving reshape (no activation transposes, no padding).
    x_flat = x_nchw.reshape(N, C, HW)

    # Tiny parameter re-layout (done once per call on a 3*3*C*C tensor):
    # w3[tap, co, ci] = w_hwio[dh, dw, ci, co]   with tap = dh*3 + dw.
    w3 = jnp.transpose(w_hwio, (0, 1, 3, 2)).reshape(9, C, C)
    b_col = b.reshape(C, 1)

    # Precompute per-tap zero-padding validity masks over flattened H*W axis.
    pos = np.arange(HW)
    h_idx = pos // W
    w_idx = pos % W
    mask_rows = []
    for dh in range(3):
        for dw in range(3):
            hv = (h_idx + dh - 1 >= 0) & (h_idx + dh - 1 <= H - 1)
            wv = (w_idx + dw - 1 >= 0) & (w_idx + dw - 1 <= W - 1)
            mask_rows.append((hv & wv).astype(np.float32))
    masks = jnp.asarray(np.stack(mask_rows, axis=0), dtype=jnp.float32)  # (9,HW)

    kernel = functools.partial(_concat_conv_kernel, W=W)

    out_flat = pl.pallas_call(
        kernel,
        out_shape=jax.ShapeDtypeStruct((N, 2 * C, HW), x_nchw.dtype),
        grid_spec=pltpu.PrefetchScalarGridSpec(
            num_scalar_prefetch=0,
            grid=(1,),   # whole problem fits comfortably in VMEM: single step
            in_specs=[
                pl.BlockSpec((9, HW), lambda i: (0, 0)),           # masks
                pl.BlockSpec((N, C, HW), lambda i: (0, 0, 0)),     # x
                pl.BlockSpec((9, C, C), lambda i: (0, 0, 0)),      # weights
                pl.BlockSpec((C, 1), lambda i: (0, 0)),            # bias
            ],
            out_specs=pl.BlockSpec((N, 2 * C, HW), lambda i: (0, 0, 0)),
        ),
        compiler_params=pltpu.CompilerParams(
            dimension_semantics=("arbitrary",)
        ),
    )(masks, x_flat, w3, b_col)

    # Free reshape back to NCHW (concat along channels already done in-kernel).
    return out_flat.reshape(N, 2 * C, H, W)


def _reference(x_nchw, w_hwio, b):
    """Plain-JAX reference: concat([x, relu(conv3x3(x) + b)], axis=1)."""
    y = jax.lax.conv_general_dilated(
        x_nchw.astype(jnp.float32),
        jnp.transpose(w_hwio, (3, 2, 0, 1)).astype(jnp.float32),  # OIHW
        window_strides=(1, 1),
        padding=((1, 1), (1, 1)),
        dimension_numbers=("NCHW", "OIHW", "NCHW"),
    )
    y = jnp.maximum(y + b.reshape(1, -1, 1, 1), 0.0)
    return jnp.concatenate([x_nchw, y.astype(x_nchw.dtype)], axis=1)


if __name__ == "__main__":
    key = jax.random.PRNGKey(0)
    k_x, k_w, k_b = jax.random.split(key, 3)

    N, C, H, W = 2, 4, 16, 16
    x = jax.random.normal(k_x, (N, C, H, W), dtype=jnp.float32)

    # Deterministic synthetic parameters for the submodule conv (HWIO layout).
    w = (jax.random.normal(k_w, (3, 3, C, C), dtype=jnp.float32)
         * (1.0 / (3.0 * 3.0 * C) ** 0.5))
    bias = jax.random.normal(k_b, (C,), dtype=jnp.float32) * 0.1

    out = concat_block(x, w, bias)
    out = jax.block_until_ready(out)

    ref = _reference(x, w, bias)
    assert out.shape == (N, 2 * C, H, W), out.shape
    assert jnp.allclose(out, ref, atol=1e-5, rtol=1e-5), (
        float(jnp.max(jnp.abs(out - ref)))
    )

    print("KERNEL_OK")
</pallas_src>

<mosaic_0001>
module attributes {stable_mosaic.version = 11 : i64} {
  func.func @_concat_conv_kernel(%arg0: i32, %arg1: memref<9x256xf32, #tpu.memory_space<vmem>>, %arg2: memref<2x4x256xf32, #tpu.memory_space<vmem>>, %arg3: memref<9x4x4xf32, #tpu.memory_space<vmem>>, %arg4: memref<4x1xf32, #tpu.memory_space<vmem>>, %arg5: memref<2x8x256xf32, #tpu.memory_space<vmem>>) attributes {dimension_semantics = [#tpu.dimension_semantics<arbitrary>], iteration_bounds = array<i64: 1>, scalar_prefetch = 0 : i64, scratch_operands = 0 : i64, tpu.core_type = #tpu.core_type<tc>, window_params = [{pipeline_mode = #tpu.pipeline_mode<synchronous>, transform_indices = @transform_0, window_bounds = array<i64: 9, 256>}, {pipeline_mode = #tpu.pipeline_mode<synchronous>, transform_indices = @transform_1, window_bounds = array<i64: 2, 4, 256>}, {pipeline_mode = #tpu.pipeline_mode<synchronous>, transform_indices = @transform_2, window_bounds = array<i64: 9, 4, 4>}, {pipeline_mode = #tpu.pipeline_mode<synchronous>, transform_indices = @transform_3, window_bounds = array<i64: 4, 1>}, {pipeline_mode = #tpu.pipeline_mode<synchronous>, transform_indices = @transform_4, window_bounds = array<i64: 2, 8, 256>}]} {
    %c0 = arith.constant 0 : index
    %c0_0 = arith.constant 0 : index
    %0 = vector.load %arg1[%c0, %c0_0] : memref<9x256xf32, #tpu.memory_space<vmem>>, vector<9x256xf32>
    %c0_1 = arith.constant 0 : index
    %c0_2 = arith.constant 0 : index
    %1 = vector.load %arg4[%c0_1, %c0_2] : memref<4x1xf32, #tpu.memory_space<vmem>>, vector<4x1xf32>
    %c0_3 = arith.constant 0 : index
    %c0_4 = arith.constant 0 : index
    %c0_5 = arith.constant 0 : index
    %2 = vector.load %arg2[%c0_3, %c0_4, %c0_5] : memref<2x4x256xf32, #tpu.memory_space<vmem>>, vector<1x4x256xf32>
    %3 = vector.shape_cast %2 : vector<1x4x256xf32> to vector<4x256xf32>
    %c0_6 = arith.constant 0 : index
    %c0_7 = arith.constant 0 : index
    %c0_8 = arith.constant 0 : index
    %4 = vector.load %arg5[%c0_6, %c0_7, %c0_8] : memref<2x8x256xf32, #tpu.memory_space<vmem>>, vector<1x4x256xf32>
    %5 = vector.shape_cast %4 : vector<1x4x256xf32> to vector<4x256xf32>
    %6 = vector.shape_cast %3 : vector<4x256xf32> to vector<1x4x256xf32>
    tpu.vector_store %arg5[%c0_6, %c0_7, %c0_8], %6 {strides = array<i32>} : memref<2x8x256xf32, #tpu.memory_space<vmem>>, vector<1x4x256xf32>,
    %c17_i32 = arith.constant 17 : i32
    %7 = tpu.dynamic_rotate %3 by %c17_i32 dim 1 : vector<4x256xf32>, i32 -> vector<4x256xf32>
    %8 = vector.extract_strided_slice %0 {offsets = [0, 0], sizes = [1, 256], strides = [1, 1]} : vector<9x256xf32> to vector<1x256xf32>
    %9 = vector.broadcast %8 : vector<1x256xf32> to vector<4x256xf32>
    %10 = arith.mulf %7, %9 : vector<4x256xf32>
    %c0_9 = arith.constant 0 : index
    %c0_10 = arith.constant 0 : index
    %c0_11 = arith.constant 0 : index
    %11 = vector.load %arg3[%c0_9, %c0_10, %c0_11] : memref<9x4x4xf32, #tpu.memory_space<vmem>>, vector<1x4x4xf32>
    %12 = vector.shape_cast %11 : vector<1x4x4xf32> to vector<4x4xf32>
    %cst = arith.constant dense<0.000000e+00> : vector<4x256xf32>
    %13 = tpu.matmul %12, %10, %cst {dimension_numbers = #tpu.dot_dimension_numbers<[1], [0], [0], [1], [0, 0, 1, 1], [], []>} : vector<4x4xf32>, vector<4x256xf32>, vector<4x256xf32> -> vector<4x256xf32>
    %c16_i32 = arith.constant 16 : i32
    %14 = tpu.dynamic_rotate %3 by %c16_i32 dim 1 : vector<4x256xf32>, i32 -> vector<4x256xf32>
    %15 = vector.extract_strided_slice %0 {offsets = [1, 0], sizes = [1, 256], strides = [1, 1]} : vector<9x256xf32> to vector<1x256xf32>
    %16 = vector.broadcast %15 : vector<1x256xf32> to vector<4x256xf32>
    %17 = arith.mulf %14, %16 : vector<4x256xf32>
    %c1 = arith.constant 1 : index
    %c0_12 = arith.constant 0 : index
    %c0_13 = arith.constant 0 : index
    %18 = vector.load %arg3[%c1, %c0_12, %c0_13] : memref<9x4x4xf32, #tpu.memory_space<vmem>>, vector<1x4x4xf32>
    %19 = vector.shape_cast %18 : vector<1x4x4xf32> to vector<4x4xf32>
    %cst_14 = arith.constant dense<0.000000e+00> : vector<4x256xf32>
    %20 = tpu.matmul %19, %17, %cst_14 {dimension_numbers = #tpu.dot_dimension_numbers<[1], [0], [0], [1], [0, 0, 1, 1], [], []>} : vector<4x4xf32>, vector<4x256xf32>, vector<4x256xf32> -> vector<4x256xf32>
    %21 = arith.addf %13, %20 : vector<4x256xf32>
    %c15_i32 = arith.constant 15 : i32
    %22 = tpu.dynamic_rotate %3 by %c15_i32 dim 1 : vector<4x256xf32>, i32 -> vector<4x256xf32>
    %23 = vector.extract_strided_slice %0 {offsets = [2, 0], sizes = [1, 256], strides = [1, 1]} : vector<9x256xf32> to vector<1x256xf32>
    %24 = vector.broadcast %23 : vector<1x256xf32> to vector<4x256xf32>
    %25 = arith.mulf %22, %24 : vector<4x256xf32>
    %c2 = arith.constant 2 : index
    %c0_15 = arith.constant 0 : index
    %c0_16 = arith.constant 0 : index
    %26 = vector.load %arg3[%c2, %c0_15, %c0_16] : memref<9x4x4xf32, #tpu.memory_space<vmem>>, vector<1x4x4xf32>
    %27 = vector.shape_cast %26 : vector<1x4x4xf32> to vector<4x4xf32>
    %cst_17 = arith.constant dense<0.000000e+00> : vector<4x256xf32>
    %28 = tpu.matmul %27, %25, %cst_17 {dimension_numbers = #tpu.dot_dimension_numbers<[1], [0], [0], [1], [0, 0, 1, 1], [], []>} : vector<4x4xf32>, vector<4x256xf32>, vector<4x256xf32> -> vector<4x256xf32>
    %29 = arith.addf %21, %28 : vector<4x256xf32>
    %c1_i32 = arith.constant 1 : i32
    %30 = tpu.dynamic_rotate %3 by %c1_i32 dim 1 : vector<4x256xf32>, i32 -> vector<4x256xf32>
    %31 = vector.extract_strided_slice %0 {offsets = [3, 0], sizes = [1, 256], strides = [1, 1]} : vector<9x256xf32> to vector<1x256xf32>
    %32 = vector.broadcast %31 : vector<1x256xf32> to vector<4x256xf32>
    %33 = arith.mulf %30, %32 : vector<4x256xf32>
    %c3 = arith.constant 3 : index
    %c0_18 = arith.constant 0 : index
    %c0_19 = arith.constant 0 : index
    %34 = vector.load %arg3[%c3, %c0_18, %c0_19] : memref<9x4x4xf32, #tpu.memory_space<vmem>>, vector<1x4x4xf32>
    %35 = vector.shape_cast %34 : vector<1x4x4xf32> to vector<4x4xf32>
    %cst_20 = arith.constant dense<0.000000e+00> : vector<4x256xf32>
    %36 = tpu.matmul %35, %33, %cst_20 {dimension_numbers = #tpu.dot_dimension_numbers<[1], [0], [0], [1], [0, 0, 1, 1], [], []>} : vector<4x4xf32>, vector<4x256xf32>, vector<4x256xf32> -> vector<4x256xf32>
    %37 = arith.addf %29, %36 : vector<4x256xf32>
    %c4 = arith.constant 4 : index
    %c0_21 = arith.constant 0 : index
    %c0_22 = arith.constant 0 : index
    %38 = vector.load %arg3[%c4, %c0_21, %c0_22] : memref<9x4x4xf32, #tpu.memory_space<vmem>>, vector<1x4x4xf32>
    %39 = vector.shape_cast %38 : vector<1x4x4xf32> to vector<4x4xf32>
    %cst_23 = arith.constant dense<0.000000e+00> : vector<4x256xf32>
    %40 = tpu.matmul %39, %3, %cst_23 {dimension_numbers = #tpu.dot_dimension_numbers<[1], [0], [0], [1], [0, 0, 1, 1], [], []>} : vector<4x4xf32>, vector<4x256xf32>, vector<4x256xf32> -> vector<4x256xf32>
    %41 = arith.addf %37, %40 : vector<4x256xf32>
    %c255_i32 = arith.constant 255 : i32
    %42 = tpu.dynamic_rotate %3 by %c255_i32 dim 1 : vector<4x256xf32>, i32 -> vector<4x256xf32>
    %43 = vector.extract_strided_slice %0 {offsets = [5, 0], sizes = [1, 256], strides = [1, 1]} : vector<9x256xf32> to vector<1x256xf32>
    %44 = vector.broadcast %43 : vector<1x256xf32> to vector<4x256xf32>
    %45 = arith.mulf %42, %44 : vector<4x256xf32>
    %c5 = arith.constant 5 : index
    %c0_24 = arith.constant 0 : index
    %c0_25 = arith.constant 0 : index
    %46 = vector.load %arg3[%c5, %c0_24, %c0_25] : memref<9x4x4xf32, #tpu.memory_space<vmem>>, vector<1x4x4xf32>
    %47 = vector.shape_cast %46 : vector<1x4x4xf32> to vector<4x4xf32>
    %cst_26 = arith.constant dense<0.000000e+00> : vector<4x256xf32>
    %48 = tpu.matmul %47, %45, %cst_26 {dimension_numbers = #tpu.dot_dimension_numbers<[1], [0], [0], [1], [0, 0, 1, 1], [], []>} : vector<4x4xf32>, vector<4x256xf32>, vector<4x256xf32> -> vector<4x256xf32>
    %49 = arith.addf %41, %48 : vector<4x256xf32>
    %c241_i32 = arith.constant 241 : i32
    %50 = tpu.dynamic_rotate %3 by %c241_i32 dim 1 : vector<4x256xf32>, i32 -> vector<4x256xf32>
    %51 = vector.extract_strided_slice %0 {offsets = [6, 0], sizes = [1, 256], strides = [1, 1]} : vector<9x256xf32> to vector<1x256xf32>
    %52 = vector.broadcast %51 : vector<1x256xf32> to vector<4x256xf32>
    %53 = arith.mulf %50, %52 : vector<4x256xf32>
    %c6 = arith.constant 6 : index
    %c0_27 = arith.constant 0 : index
    %c0_28 = arith.constant 0 : index
    %54 = vector.load %arg3[%c6, %c0_27, %c0_28] : memref<9x4x4xf32, #tpu.memory_space<vmem>>, vector<1x4x4xf32>
    %55 = vector.shape_cast %54 : vector<1x4x4xf32> to vector<4x4xf32>
    %cst_29 = arith.constant dense<0.000000e+00> : vector<4x256xf32>
    %56 = tpu.matmul %55, %53, %cst_29 {dimension_numbers = #tpu.dot_dimension_numbers<[1], [0], [0], [1], [0, 0, 1, 1], [], []>} : vector<4x4xf32>, vector<4x256xf32>, vector<4x256xf32> -> vector<4x256xf32>
    %57 = arith.addf %49, %56 : vector<4x256xf32>
    %c240_i32 = arith.constant 240 : i32
    %58 = tpu.dynamic_rotate %3 by %c240_i32 dim 1 : vector<4x256xf32>, i32 -> vector<4x256xf32>
    %59 = vector.extract_strided_slice %0 {offsets = [7, 0], sizes = [1, 256], strides = [1, 1]} : vector<9x256xf32> to vector<1x256xf32>
    %60 = vector.broadcast %59 : vector<1x256xf32> to vector<4x256xf32>
    %61 = arith.mulf %58, %60 : vector<4x256xf32>
    %c7 = arith.constant 7 : index
    %c0_30 = arith.constant 0 : index
    %c0_31 = arith.constant 0 : index
    %62 = vector.load %arg3[%c7, %c0_30, %c0_31] : memref<9x4x4xf32, #tpu.memory_space<vmem>>, vector<1x4x4xf32>
    %63 = vector.shape_cast %62 : vector<1x4x4xf32> to vector<4x4xf32>
    %cst_32 = arith.constant dense<0.000000e+00> : vector<4x256xf32>
    %64 = tpu.matmul %63, %61, %cst_32 {dimension_numbers = #tpu.dot_dimension_numbers<[1], [0], [0], [1], [0, 0, 1, 1], [], []>} : vector<4x4xf32>, vector<4x256xf32>, vector<4x256xf32> -> vector<4x256xf32>
    %65 = arith.addf %57, %64 : vector<4x256xf32>
    %c239_i32 = arith.constant 239 : i32
    %66 = tpu.dynamic_rotate %3 by %c239_i32 dim 1 : vector<4x256xf32>, i32 -> vector<4x256xf32>
    %67 = vector.extract_strided_slice %0 {offsets = [8, 0], sizes = [1, 256], strides = [1, 1]} : vector<9x256xf32> to vector<1x256xf32>
    %68 = vector.broadcast %67 : vector<1x256xf32> to vector<4x256xf32>
    %69 = arith.mulf %66, %68 : vector<4x256xf32>
    %c8 = arith.constant 8 : index
    %c0_33 = arith.constant 0 : index
    %c0_34 = arith.constant 0 : index
    %70 = vector.load %arg3[%c8, %c0_33, %c0_34] : memref<9x4x4xf32, #tpu.memory_space<vmem>>, vector<1x4x4xf32>
    %71 = vector.shape_cast %70 : vector<1x4x4xf32> to vector<4x4xf32>
    %cst_35 = arith.constant dense<0.000000e+00> : vector<4x256xf32>
    %72 = tpu.matmul %71, %69, %cst_35 {dimension_numbers = #tpu.dot_dimension_numbers<[1], [0], [0], [1], [0, 0, 1, 1], [], []>} : vector<4x4xf32>, vector<4x256xf32>, vector<4x256xf32> -> vector<4x256xf32>
    %73 = arith.addf %65, %72 : vector<4x256xf32>
    %74 = vector.broadcast %1 : vector<4x1xf32> to vector<4x256xf32>
    %75 = arith.addf %73, %74 : vector<4x256xf32>
    %cst_36 = arith.constant 0.000000e+00 : f32
    %76 = vector.broadcast %cst_36 : f32 to vector<4x256xf32>
    %77 = arith.maximumf %75, %76 : vector<4x256xf32>
    %c0_37 = arith.constant 0 : index
    %c4_38 = arith.constant 4 : index
    %c0_39 = arith.constant 0 : index
    %78 = vector.load %arg5[%c0_37, %c4_38, %c0_39] : memref<2x8x256xf32, #tpu.memory_space<vmem>>, vector<1x4x256xf32>
    %79 = vector.shape_cast %78 : vector<1x4x256xf32> to vector<4x256xf32>
    %80 = vector.shape_cast %77 : vector<4x256xf32> to vector<1x4x256xf32>
    tpu.vector_store %arg5[%c0_37, %c4_38, %c0_39], %80 {strides = array<i32>} : memref<2x8x256xf32, #tpu.memory_space<vmem>>, vector<1x4x256xf32>,
    %c1_40 = arith.constant 1 : index
    %c0_41 = arith.constant 0 : index
    %c0_42 = arith.constant 0 : index
    %81 = vector.load %arg2[%c1_40, %c0_41, %c0_42] : memref<2x4x256xf32, #tpu.memory_space<vmem>>, vector<1x4x256xf32>
    %82 = vector.shape_cast %81 : vector<1x4x256xf32> to vector<4x256xf32>
    %c1_43 = arith.constant 1 : index
    %c0_44 = arith.constant 0 : index
    %c0_45 = arith.constant 0 : index
    %83 = vector.load %arg5[%c1_43, %c0_44, %c0_45] : memref<2x8x256xf32, #tpu.memory_space<vmem>>, vector<1x4x256xf32>
    %84 = vector.shape_cast %83 : vector<1x4x256xf32> to vector<4x256xf32>
    %85 = vector.shape_cast %82 : vector<4x256xf32> to vector<1x4x256xf32>
    tpu.vector_store %arg5[%c1_43, %c0_44, %c0_45], %85 {strides = array<i32>} : memref<2x8x256xf32, #tpu.memory_space<vmem>>, vector<1x4x256xf32>,
    %c17_i32_46 = arith.constant 17 : i32
    %86 = tpu.dynamic_rotate %82 by %c17_i32_46 dim 1 : vector<4x256xf32>, i32 -> vector<4x256xf32>
    %87 = vector.extract_strided_slice %0 {offsets = [0, 0], sizes = [1, 256], strides = [1, 1]} : vector<9x256xf32> to vector<1x256xf32>
    %88 = vector.broadcast %87 : vector<1x256xf32> to vector<4x256xf32>
    %89 = arith.mulf %86, %88 : vector<4x256xf32>
    %c0_47 = arith.constant 0 : index
    %c0_48 = arith.constant 0 : index
    %c0_49 = arith.constant 0 : index
    %90 = vector.load %arg3[%c0_47, %c0_48, %c0_49] : memref<9x4x4xf32, #tpu.memory_space<vmem>>, vector<1x4x4xf32>
    %91 = vector.shape_cast %90 : vector<1x4x4xf32> to vector<4x4xf32>
    %cst_50 = arith.constant dense<0.000000e+00> : vector<4x256xf32>
    %92 = tpu.matmul %91, %89, %cst_50 {dimension_numbers = #tpu.dot_dimension_numbers<[1], [0], [0], [1], [0, 0, 1, 1], [], []>} : vector<4x4xf32>, vector<4x256xf32>, vector<4x256xf32> -> vector<4x256xf32>
    %c16_i32_51 = arith.constant 16 : i32
    %93 = tpu.dynamic_rotate %82 by %c16_i32_51 dim 1 : vector<4x256xf32>, i32 -> vector<4x256xf32>
    %94 = vector.extract_strided_slice %0 {offsets = [1, 0], sizes = [1, 256], strides = [1, 1]} : vector<9x256xf32> to vector<1x256xf32>
    %95 = vector.broadcast %94 : vector<1x256xf32> to vector<4x256xf32>
    %96 = arith.mulf %93, %95 : vector<4x256xf32>
    %c1_52 = arith.constant 1 : index
    %c0_53 = arith.constant 0 : index
    %c0_54 = arith.constant 0 : index
    %97 = vector.load %arg3[%c1_52, %c0_53, %c0_54] : memref<9x4x4xf32, #tpu.memory_space<vmem>>, vector<1x4x4xf32>
    %98 = vector.shape_cast %97 : vector<1x4x4xf32> to vector<4x4xf32>
    %cst_55 = arith.constant dense<0.000000e+00> : vector<4x256xf32>
    %99 = tpu.matmul %98, %96, %cst_55 {dimension_numbers = #tpu.dot_dimension_numbers<[1], [0], [0], [1], [0, 0, 1, 1], [], []>} : vector<4x4xf32>, vector<4x256xf32>, vector<4x256xf32> -> vector<4x256xf32>
    %100 = arith.addf %92, %99 : vector<4x256xf32>
    %c15_i32_56 = arith.constant 15 : i32
    %101 = tpu.dynamic_rotate %82 by %c15_i32_56 dim 1 : vector<4x256xf32>, i32 -> vector<4x256xf32>
    %102 = vector.extract_strided_slice %0 {offsets = [2, 0], sizes = [1, 256], strides = [1, 1]} : vector<9x256xf32> to vector<1x256xf32>
    %103 = vector.broadcast %102 : vector<1x256xf32> to vector<4x256xf32>
    %104 = arith.mulf %101, %103 : vector<4x256xf32>
    %c2_57 = arith.constant 2 : index
    %c0_58 = arith.constant 0 : index
    %c0_59 = arith.constant 0 : index
    %105 = vector.load %arg3[%c2_57, %c0_58, %c0_59] : memref<9x4x4xf32, #tpu.memory_space<vmem>>, vector<1x4x4xf32>
    %106 = vector.shape_cast %105 : vector<1x4x4xf32> to vector<4x4xf32>
    %cst_60 = arith.constant dense<0.000000e+00> : vector<4x256xf32>
    %107 = tpu.matmul %106, %104, %cst_60 {dimension_numbers = #tpu.dot_dimension_numbers<[1], [0], [0], [1], [0, 0, 1, 1], [], []>} : vector<4x4xf32>, vector<4x256xf32>, vector<4x256xf32> -> vector<4x256xf32>
    %108 = arith.addf %100, %107 : vector<4x256xf32>
    %c1_i32_61 = arith.constant 1 : i32
    %109 = tpu.dynamic_rotate %82 by %c1_i32_61 dim 1 : vector<4x256xf32>, i32 -> vector<4x256xf32>
    %110 = vector.extract_strided_slice %0 {offsets = [3, 0], sizes = [1, 256], strides = [1, 1]} : vector<9x256xf32> to vector<1x256xf32>
    %111 = vector.broadcast %110 : vector<1x256xf32> to vector<4x256xf32>
    %112 = arith.mulf %109, %111 : vector<4x256xf32>
    %c3_62 = arith.constant 3 : index
    %c0_63 = arith.constant 0 : index
    %c0_64 = arith.constant 0 : index
    %113 = vector.load %arg3[%c3_62, %c0_63, %c0_64] : memref<9x4x4xf32, #tpu.memory_space<vmem>>, vector<1x4x4xf32>
    %114 = vector.shape_cast %113 : vector<1x4x4xf32> to vector<4x4xf32>
    %cst_65 = arith.constant dense<0.000000e+00> : vector<4x256xf32>
    %115 = tpu.matmul %114, %112, %cst_65 {dimension_numbers = #tpu.dot_dimension_numbers<[1], [0], [0], [1], [0, 0, 1, 1], [], []>} : vector<4x4xf32>, vector<4x256xf32>, vector<4x256xf32> -> vector<4x256xf32>
    %116 = arith.addf %108, %115 : vector<4x256xf32>
    %c4_66 = arith.constant 4 : index
    %c0_67 = arith.constant 0 : index
    %c0_68 = arith.constant 0 : index
    %117 = vector.load %arg3[%c4_66, %c0_67, %c0_68] : memref<9x4x4xf32, #tpu.memory_space<vmem>>, vector<1x4x4xf32>
    %118 = vector.shape_cast %117 : vector<1x4x4xf32> to vector<4x4xf32>
    %cst_69 = arith.constant dense<0.000000e+00> : vector<4x256xf32>
    %119 = tpu.matmul %118, %82, %cst_69 {dimension_numbers = #tpu.dot_dimension_numbers<[1], [0], [0], [1], [0, 0, 1, 1], [], []>} : vector<4x4xf32>, vector<4x256xf32>, vector<4x256xf32> -> vector<4x256xf32>
    %120 = arith.addf %116, %119 : vector<4x256xf32>
    %c255_i32_70 = arith.constant 255 : i32
    %121 = tpu.dynamic_rotate %82 by %c255_i32_70 dim 1 : vector<4x256xf32>, i32 -> vector<4x256xf32>
    %122 = vector.extract_strided_slice %0 {offsets = [5, 0], sizes = [1, 256], strides = [1, 1]} : vector<9x256xf32> to vector<1x256xf32>
    %123 = vector.broadcast %122 : vector<1x256xf32> to vector<4x256xf32>
    %124 = arith.mulf %121, %123 : vector<4x256xf32>
    %c5_71 = arith.constant 5 : index
    %c0_72 = arith.constant 0 : index
    %c0_73 = arith.constant 0 : index
    %125 = vector.load %arg3[%c5_71, %c0_72, %c0_73] : memref<9x4x4xf32, #tpu.memory_space<vmem>>, vector<1x4x4xf32>
    %126 = vector.shape_cast %125 : vector<1x4x4xf32> to vector<4x4xf32>
    %cst_74 = arith.constant dense<0.000000e+00> : vector<4x256xf32>
    %127 = tpu.matmul %126, %124, %cst_74 {dimension_numbers = #tpu.dot_dimension_numbers<[1], [0], [0], [1], [0, 0, 1, 1], [], []>} : vector<4x4xf32>, vector<4x256xf32>, vector<4x256xf32> -> vector<4x256xf32>
    %128 = arith.addf %120, %127 : vector<4x256xf32>
    %c241_i32_75 = arith.constant 241 : i32
    %129 = tpu.dynamic_rotate %82 by %c241_i32_75 dim 1 : vector<4x256xf32>, i32 -> vector<4x256xf32>
    %130 = vector.extract_strided_slice %0 {offsets = [6, 0], sizes = [1, 256], strides = [1, 1]} : vector<9x256xf32> to vector<1x256xf32>
    %131 = vector.broadcast %130 : vector<1x256xf32> to vector<4x256xf32>
    %132 = arith.mulf %129, %131 : vector<4x256xf32>
    %c6_76 = arith.constant 6 : index
    %c0_77 = arith.constant 0 : index
    %c0_78 = arith.constant 0 : index
    %133 = vector.load %arg3[%c6_76, %c0_77, %c0_78] : memref<9x4x4xf32, #tpu.memory_space<vmem>>, vector<1x4x4xf32>
    %134 = vector.shape_cast %133 : vector<1x4x4xf32> to vector<4x4xf32>
    %cst_79 = arith.constant dense<0.000000e+00> : vector<4x256xf32>
    %135 = tpu.matmul %134, %132, %cst_79 {dimension_numbers = #tpu.dot_dimension_numbers<[1], [0], [0], [1], [0, 0, 1, 1], [], []>} : vector<4x4xf32>, vector<4x256xf32>, vector<4x256xf32> -> vector<4x256xf32>
    %136 = arith.addf %128, %135 : vector<4x256xf32>
    %c240_i32_80 = arith.constant 240 : i32
    %137 = tpu.dynamic_rotate %82 by %c240_i32_80 dim 1 : vector<4x256xf32>, i32 -> vector<4x256xf32>
    %138 = vector.extract_strided_slice %0 {offsets = [7, 0], sizes = [1, 256], strides = [1, 1]} : vector<9x256xf32> to vector<1x256xf32>
    %139 = vector.broadcast %138 : vector<1x256xf32> to vector<4x256xf32>
    %140 = arith.mulf %137, %139 : vector<4x256xf32>
    %c7_81 = arith.constant 7 : index
    %c0_82 = arith.constant 0 : index
    %c0_83 = arith.constant 0 : index
    %141 = vector.load %arg3[%c7_81, %c0_82, %c0_83] : memref<9x4x4xf32, #tpu.memory_space<vmem>>, vector<1x4x4xf32>
    %142 = vector.shape_cast %141 : vector<1x4x4xf32> to vector<4x4xf32>
    %cst_84 = arith.constant dense<0.000000e+00> : vector<4x256xf32>
    %143 = tpu.matmul %142, %140, %cst_84 {dimension_numbers = #tpu.dot_dimension_numbers<[1], [0], [0], [1], [0, 0, 1, 1], [], []>} : vector<4x4xf32>, vector<4x256xf32>, vector<4x256xf32> -> vector<4x256xf32>
    %144 = arith.addf %136, %143 : vector<4x256xf32>
    %c239_i32_85 = arith.constant 239 : i32
    %145 = tpu.dynamic_rotate %82 by %c239_i32_85 dim 1 : vector<4x256xf32>, i32 -> vector<4x256xf32>
    %146 = vector.extract_strided_slice %0 {offsets = [8, 0], sizes = [1, 256], strides = [1, 1]} : vector<9x256xf32> to vector<1x256xf32>
    %147 = vector.broadcast %146 : vector<1x256xf32> to vector<4x256xf32>
    %148 = arith.mulf %145, %147 : vector<4x256xf32>
    %c8_86 = arith.constant 8 : index
    %c0_87 = arith.constant 0 : index
    %c0_88 = arith.constant 0 : index
    %149 = vector.load %arg3[%c8_86, %c0_87, %c0_88] : memref<9x4x4xf32, #tpu.memory_space<vmem>>, vector<1x4x4xf32>
    %150 = vector.shape_cast %149 : vector<1x4x4xf32> to vector<4x4xf32>
    %cst_89 = arith.constant dense<0.000000e+00> : vector<4x256xf32>
    %151 = tpu.matmul %150, %148, %cst_89 {dimension_numbers = #tpu.dot_dimension_numbers<[1], [0], [0], [1], [0, 0, 1, 1], [], []>} : vector<4x4xf32>, vector<4x256xf32>, vector<4x256xf32> -> vector<4x256xf32>
    %152 = arith.addf %144, %151 : vector<4x256xf32>
    %153 = vector.broadcast %1 : vector<4x1xf32> to vector<4x256xf32>
    %154 = arith.addf %152, %153 : vector<4x256xf32>
    %cst_90 = arith.constant 0.000000e+00 : f32
    %155 = vector.broadcast %cst_90 : f32 to vector<4x256xf32>
    %156 = arith.maximumf %154, %155 : vector<4x256xf32>
    %c1_91 = arith.constant 1 : index
    %c4_92 = arith.constant 4 : index
    %c0_93 = arith.constant 0 : index
    %157 = vector.load %arg5[%c1_91, %c4_92, %c0_93] : memref<2x8x256xf32, #tpu.memory_space<vmem>>, vector<1x4x256xf32>
    %158 = vector.shape_cast %157 : vector<1x4x256xf32> to vector<4x256xf32>
    %159 = vector.shape_cast %156 : vector<4x256xf32> to vector<1x4x256xf32>
    tpu.vector_store %arg5[%c1_91, %c4_92, %c0_93], %159 {strides = array<i32>} : memref<2x8x256xf32, #tpu.memory_space<vmem>>, vector<1x4x256xf32>,
    return
  }
  func.func @transform_0(%arg0: i32) -> (i32, i32) {
    %c0_i32 = arith.constant 0 : i32
    %c0_i32_0 = arith.constant 0 : i32
    %c0_i32_1 = arith.constant 0 : i32
    return %c0_i32, %c0_i32_0 : i32, i32
  }
  func.func @transform_1(%arg0: i32) -> (i32, i32, i32) {
    %c0_i32 = arith.constant 0 : i32
    %c0_i32_0 = arith.constant 0 : i32
    %c0_i32_1 = arith.constant 0 : i32
    %c0_i32_2 = arith.constant 0 : i32
    return %c0_i32, %c0_i32_0, %c0_i32_1 : i32, i32, i32
  }
  func.func @transform_2(%arg0: i32) -> (i32, i32, i32) {
    %c0_i32 = arith.constant 0 : i32
    %c0_i32_0 = arith.constant 0 : i32
    %c0_i32_1 = arith.constant 0 : i32
    %c0_i32_2 = arith.constant 0 : i32
    return %c0_i32, %c0_i32_0, %c0_i32_1 : i32, i32, i32
  }
  func.func @transform_3(%arg0: i32) -> (i32, i32) {
    %c0_i32 = arith.constant 0 : i32
    %c0_i32_0 = arith.constant 0 : i32
    %c0_i32_1 = arith.constant 0 : i32
    return %c0_i32, %c0_i32_0 : i32, i32
  }
  func.func @transform_4(%arg0: i32) -> (i32, i32, i32) {
    %c0_i32 = arith.constant 0 : i32
    %c0_i32_0 = arith.constant 0 : i32
    %c0_i32_1 = arith.constant 0 : i32
    %c0_i32_2 = arith.constant 0 : i32
    return %c0_i32, %c0_i32_0, %c0_i32_1 : i32, i32, i32
  }
}

</mosaic_0001>

<llo_original>
// kernel: tpu_custom_call.1
$region0: #{tpu_custom_call.1}
  #allocation0 [shape = 'u32[]', space=smem, size = 0x4, offset = 0x4, fixed_abs, tag = 'smem constant byte address 0x4 - core index']
  #allocation1 [shape = 'u32[144,128]{1,0:T(1,128)}', space=vmem, size = 0x12000, scoped, tag = 'internal scratch']
  %s0 = inlined_call_operand.vmem [shape: f32[9,256], index: 0, kind: input, shape index: {}]
  %s1 = inlined_call_operand.vmem [shape: f32[2,4,256], index: 1, kind: input, shape index: {}]
  %s2 = inlined_call_operand.vmem [shape: f32[9,4,4], index: 2, kind: input, shape index: {}]
  %s3 = inlined_call_operand.vmem [shape: f32[4,1], index: 3, kind: input, shape index: {}]
  %s4 = inlined_call_operand.hbm [shape: f32[2,8,256], index: 4, kind: output, shape index: {}]
  %s5 = sld [smem:[#allocation0]]
  $region26: #{tpu_custom_call.1} parent=0
    _
  %s7 = ssub.s32 1, %s5
  %s8 = scalar_select 0, %s7, %s5
  $region1: #{tpu_custom_call.1} parent=0
    #allocation2 [shape = 'u8[16384]{0}', space=vmem, size = 0x4000, scoped, tag = 'output window, operand 0, single buffered']
    #allocation3 [shape = 's32[1]{0}', space=sflag, size = 0x4, scoped, tag = 'scoped memory for tpu_custom_call.1']
    %9 = vsyncpa [#allocation3], 0
    // Predicated region
    $region2: #{tpu_custom_call.1} parent=1 // pred_check
      _
    $region3: #{tpu_custom_call.1} parent=1 // pred_check_branch
      %11 = sbr.rel (0) target = $region5
    $region4: #{tpu_custom_call.1} parent=1 // pred_region
      _
    $region5: #{tpu_custom_call.1} parent=1 // pred_fallthru
      _
    // Predicated region
    $region6: #{tpu_custom_call.1} parent=1 // pred_check
      _
    $region7: #{tpu_custom_call.1} parent=1 // pred_check_branch
      %13 = sbr.rel (0) target = $region9
    $region8: #{tpu_custom_call.1} parent=1 // pred_region
      _
    $region9: #{tpu_custom_call.1} parent=1 // pred_fallthru
      _
    // Predicated region
    $region10: #{tpu_custom_call.1} parent=1 // pred_check
      _
    $region11: #{tpu_custom_call.1} parent=1 // pred_check_branch
      %15 = sbr.rel (0) target = $region13
    $region12: #{tpu_custom_call.1} parent=1 // pred_region
      _
    $region13: #{tpu_custom_call.1} parent=1 // pred_fallthru
      _
    // Predicated region
    $region14: #{tpu_custom_call.1} parent=1 // pred_check
      _
    $region15: #{tpu_custom_call.1} parent=1 // pred_check_branch
      %17 = sbr.rel (0) target = $region17
    $region16: #{tpu_custom_call.1} parent=1 // pred_region
      _
    $region17: #{tpu_custom_call.1} parent=1 // pred_fallthru
      _
    %v18 = vld [vmem:[%s0] sm:$0xff]
    %v19 = vld [vmem:[%s0 + $0x8] sm:$0xff]
    %v20 = vld [vmem:[%s0 + $0x10] sm:$0x1]
    %v21 = vld [vmem:[%s0 + $0x18] sm:$0x1]
    %v22 = vld [vmem:[%s3] sm:$0xf]
    %v23 = vld [vmem:[%s1] sm:$0xff]
    %v25 = vcombine.high %v23, %v23
    %27 = vst [vmem:[#allocation2] sm:$0xf] %v23
    %28 = vst [vmem:[#allocation2 + $0x8] sm:$0xf] %v25
    %29 = vrot.lane.b32.xlu0 %v23, 17
    %v30 = vpop.permute.xlu0 %29
    %31 = vrot.lane.b32.xlu0 %v25, 17
    %v32 = vpop.permute.xlu0 %31
    %v33 = vlaneseq
    %v34 = vand.u32 %v33, 127
    %vm35 = vcmp.lt.s32.totalorder %v34, 17
    %v36 = vsel %vm35, %v30, %v32
    %v37 = vsel %vm35, %v32, %v30
    %v38 = vlaneseq
    %v39 = vshrl.u32 %v38, 7
    %v40 = vsub.s32 0, %v39
    %v41 = vrot.slane %v18, %v40
    %v42 = vlaneseq
    %v43 = vshrl.u32 %v42, 7
    %v44 = vsub.s32 0, %v43
    %v45 = vrot.slane %v19, %v44
    %v46 = vmul.f32 %v37, %v41
    %v47 = vmul.f32 %v36, %v45
    %v48 = vld [vmem:[%s2] sm:$0xf]
    %49 = vrot.lane.b32.xlu0 %v23, 16
    %v50 = vpop.permute.xlu0 %49
    %51 = vrot.lane.b32.xlu0 %v25, 16
    %v52 = vpop.permute.xlu0 %51
    %vm53 = vcmp.lt.s32.totalorder %v34, 16
    %v54 = vsel %vm53, %v50, %v52
    %v55 = vsel %vm53, %v52, %v50
    %v56 = vlaneseq
    %v57 = vshrl.u32 %v56, 7
    %v58 = vsub.s32 1, %v57
    %v59 = vrot.slane %v18, %v58
    %v60 = vlaneseq
    %v61 = vshrl.u32 %v60, 7
    %v62 = vsub.s32 1, %v61
    %v63 = vrot.slane %v19, %v62
    %v64 = vmul.f32 %v55, %v59
    %v65 = vmul.f32 %v54, %v63
    %s66 = scalar_lea.vmem %s2, 4
    %v67 = vld [vmem:[%s66] sm:$0xf]
    %vm68 = vcmask 31744
    %v70 = vsel %vm68, %v67, 0
    %vm72 = vcmask 1043456
    %v74 = vsel %vm72, %v64, 0
    %v77 = vsel %vm72, %v65, 0
    %79 = vmatprep.subr.mxu0 %v77
    %80 = vmatpush1.msra.mxu0 %v74
    %81 = vmatprep.subr.mxu0 0.0
    %82 = vmatpush1.msra.mxu0 0.0
    %83 = vmatprep.subr.mxu0 0.0
    %84 = vmatpush1.msra.mxu0 0.0
    %85 = vmatprep.subr.mxu0 0.0
    %86 = vmatpush1.msra.mxu0 0.0
    %87 = vmatprep.subr.mxu0 0.0
    %88 = vmatpush1.msra.mxu0 0.0
    %89 = vmatprep.subr.mxu0 0.0
    %90 = vmatpush1.msra.mxu0 0.0
    %91 = vmatprep.subr.mxu0 0.0
    %92 = vmatpush1.msra.mxu0 0.0
    %93 = vmatprep.subr.mxu0 0.0
    %94 = vmatpush1.msra.mxu0 0.0
    %95 = vmatprep.subr.mxu0 0.0
    %96 = vmatpush1.msra.mxu0 0.0
    %97 = vmatprep.subr.mxu0 0.0
    %98 = vmatpush1.msra.mxu0 0.0
    %99 = vmatprep.subr.mxu0 0.0
    %100 = vmatpush1.msra.mxu0 0.0
    %101 = vmatprep.subr.mxu0 0.0
    %102 = vmatpush1.msra.mxu0 0.0
    %103 = vmatprep.subr.mxu0 0.0
    %104 = vmatpush1.msra.mxu0 0.0
    %105 = vmatprep.subr.mxu0 0.0
    %106 = vmatpush1.msra.mxu0 0.0
    %107 = vmatprep.subr.mxu0 0.0
    %108 = vmatpush1.msra.mxu0 0.0
    %109 = vmatprep.subr.mxu0 0.0
    %110 = vmatpush1.msra.mxu0 0.0
    %111 = vmatprep.subr.mxu0 0.0
    %112 = vmatpush1.msra.mxu0 0.0
    %113 = vmatprep.subr.mxu0 0.0
    %114 = vmatpush1.msra.mxu0 0.0
    %115 = vmatprep.subr.mxu0 0.0
    %116 = vmatpush1.msra.mxu0 0.0
    %117 = vmatprep.subr.mxu0 0.0
    %118 = vmatpush1.msra.mxu0 0.0
    %119 = vmatprep.subr.mxu0 0.0
    %120 = vmatpush1.msra.mxu0 0.0
    %121 = vmatprep.subr.mxu0 0.0
    %122 = vmatpush1.msra.mxu0 0.0
    %123 = vmatprep.subr.mxu0 0.0
    %124 = vmatpush1.msra.mxu0 0.0
    %125 = vmatprep.subr.mxu0 0.0
    %126 = vmatpush1.msra.mxu0 0.0
    %127 = vmatprep.subr.mxu0 0.0
    %128 = vmatpush1.msra.mxu0 0.0
    %129 = vmatprep.subr.mxu0 0.0
    %130 = vmatpush1.msra.mxu0 0.0
    %131 = vmatprep.subr.mxu0 0.0
    %132 = vmatpush1.msra.mxu0 0.0
    %133 = vmatprep.subr.mxu0 0.0
    %134 = vmatpush1.msra.mxu0 0.0
    %135 = vmatprep.subr.mxu0 0.0
    %136 = vmatpush1.msra.mxu0 0.0
    %137 = vmatprep.subr.mxu0 0.0
    %138 = vmatpush1.msra.mxu0 0.0
    %139 = vmatprep.subr.mxu0 0.0
    %140 = vmatpush1.msra.mxu0 0.0
    %141 = vmatprep.subr.mxu0 0.0
    %142 = vmatpush1.msra.mxu0 0.0
    %143 = vmatprep.mubr.f32.mxu0 0.0
    %144 = vmatmul.mubr.f32.gmra.mrb[0].mxu0 %v70
    %v145 = vpop.f32.mrb[0].mxu0
    %v146 = vadd.f32 0.0, %v145
    %v147 = vpop.f32.mrb[0].mxu0
    %v148 = vadd.f32 0.0, %v147
    %149 = vdwg.mxu0
    %v151 = vsel %vm68, %v48, 0
    %v154 = vsel %vm72, %v46, 0
    %v157 = vsel %vm72, %v47, 0
    %159 = vmatprep.subr.mxu0 %v157
    %160 = vmatpush1.msra.mxu0 %v154
    %161 = vmatprep.subr.mxu0 0.0
    %162 = vmatpush1.msra.mxu0 0.0
    %163 = vmatprep.subr.mxu0 0.0
    %164 = vmatpush1.msra.mxu0 0.0
    %165 = vmatprep.subr.mxu0 0.0
    %166 = vmatpush1.msra.mxu0 0.0
    %167 = vmatprep.subr.mxu0 0.0
    %168 = vmatpush1.msra.mxu0 0.0
    %169 = vmatprep.subr.mxu0 0.0
    %170 = vmatpush1.msra.mxu0 0.0
    %171 = vmatprep.subr.mxu0 0.0
    %172 = vmatpush1.msra.mxu0 0.0
    %173 = vmatprep.subr.mxu0 0.0
    %174 = vmatpush1.msra.mxu0 0.0
    %175 = vmatprep.subr.mxu0 0.0
    %176 = vmatpush1.msra.mxu0 0.0
    %177 = vmatprep.subr.mxu0 0.0
    %178 = vmatpush1.msra.mxu0 0.0
    %179 = vmatprep.subr.mxu0 0.0
    %180 = vmatpush1.msra.mxu0 0.0
    %181 = vmatprep.subr.mxu0 0.0
    %182 = vmatpush1.msra.mxu0 0.0
    %183 = vmatprep.subr.mxu0 0.0
    %184 = vmatpush1.msra.mxu0 0.0
    %185 = vmatprep.subr.mxu0 0.0
    %186 = vmatpush1.msra.mxu0 0.0
    %187 = vmatprep.subr.mxu0 0.0
    %188 = vmatpush1.msra.mxu0 0.0
    %189 = vmatprep.subr.mxu0 0.0
    %190 = vmatpush1.msra.mxu0 0.0
    %191 = vmatprep.subr.mxu0 0.0
    %192 = vmatpush1.msra.mxu0 0.0
    %193 = vmatprep.subr.mxu0 0.0
    %194 = vmatpush1.msra.mxu0 0.0
    %195 = vmatprep.subr.mxu0 0.0
    %196 = vmatpush1.msra.mxu0 0.0
    %197 = vmatprep.subr.mxu0 0.0
    %198 = vmatpush1.msra.mxu0 0.0
    %199 = vmatprep.subr.mxu0 0.0
    %200 = vmatpush1.msra.mxu0 0.0
    %201 = vmatprep.subr.mxu0 0.0
    %202 = vmatpush1.msra.mxu0 0.0
    %203 = vmatprep.subr.mxu0 0.0
    %204 = vmatpush1.msra.mxu0 0.0
    %205 = vmatprep.subr.mxu0 0.0
    %206 = vmatpush1.msra.mxu0 0.0
    %207 = vmatprep.subr.mxu0 0.0
    %208 = vmatpush1.msra.mxu0 0.0
    %209 = vmatprep.subr.mxu0 0.0
    %210 = vmatpush1.msra.mxu0 0.0
    %211 = vmatprep.subr.mxu0 0.0
    %212 = vmatpush1.msra.mxu0 0.0
    %213 = vmatprep.subr.mxu0 0.0
    %214 = vmatpush1.msra.mxu0 0.0
    %215 = vmatprep.subr.mxu0 0.0
    %216 = vmatpush1.msra.mxu0 0.0
    %217 = vmatprep.subr.mxu0 0.0
    %218 = vmatpush1.msra.mxu0 0.0
    %219 = vmatprep.subr.mxu0 0.0
    %220 = vmatpush1.msra.mxu0 0.0
    %221 = vmatprep.subr.mxu0 0.0
    %222 = vmatpush1.msra.mxu0 0.0
    %223 = vmatprep.mubr.f32.mxu0 0.0
    %224 = vmatmul.mubr.f32.gmra.mrb[0].mxu0 %v151
    %v225 = vpop.f32.mrb[0].mxu0
    %v226 = vadd.f32 %v146, %v225
    %v227 = vpop.f32.mrb[0].mxu0
    %v228 = vadd.f32 %v148, %v227
    %229 = vdwg.mxu0
    %230 = vrot.lane.b32.xlu0 %v23, 15
    %v231 = vpop.permute.xlu0 %230
    %232 = vrot.lane.b32.xlu0 %v25, 15
    %v233 = vpop.permute.xlu0 %232
    %vm234 = vcmp.lt.s32.totalorder %v34, 15
    %v235 = vsel %vm234, %v231, %v233
    %v236 = vsel %vm234, %v233, %v231
    %v237 = vlaneseq
    %v238 = vshrl.u32 %v237, 7
    %v239 = vsub.s32 2, %v238
    %v240 = vrot.slane %v18, %v239
    %v241 = vlaneseq
    %v242 = vshrl.u32 %v241, 7
    %v243 = vsub.s32 2, %v242
    %v244 = vrot.slane %v19, %v243
    %v245 = vmul.f32 %v236, %v240
    %v246 = vmul.f32 %v235, %v244
    %s247 = scalar_lea.vmem %s2, 8
    %v248 = vld [vmem:[%s247] sm:$0xf]
    %v250 = vsel %vm68, %v248, 0
    %v253 = vsel %vm72, %v245, 0
    %v256 = vsel %vm72, %v246, 0
    %258 = vmatprep.subr.mxu0 %v256
    %259 = vmatpush1.msra.mxu0 %v253
    %260 = vmatprep.subr.mxu0 0.0
    %261 = vmatpush1.msra.mxu0 0.0
    %262 = vmatprep.subr.mxu0 0.0
    %263 = vmatpush1.msra.mxu0 0.0
    %264 = vmatprep.subr.mxu0 0.0
    %265 = vmatpush1.msra.mxu0 0.0
    %266 = vmatprep.subr.mxu0 0.0
    %267 = vmatpush1.msra.mxu0 0.0
    %268 = vmatprep.subr.mxu0 0.0
    %269 = vmatpush1.msra.mxu0 0.0
    %270 = vmatprep.subr.mxu0 0.0
    %271 = vmatpush1.msra.mxu0 0.0
    %272 = vmatprep.subr.mxu0 0.0
    %273 = vmatpush1.msra.mxu0 0.0
    %274 = vmatprep.subr.mxu0 0.0
    %275 = vmatpush1.msra.mxu0 0.0
    %276 = vmatprep.subr.mxu0 0.0
    %277 = vmatpush1.msra.mxu0 0.0
    %278 = vmatprep.subr.mxu0 0.0
    %279 = vmatpush1.msra.mxu0 0.0
    %280 = vmatprep.subr.mxu0 0.0
    %281 = vmatpush1.msra.mxu0 0.0
    %282 = vmatprep.subr.mxu0 0.0
    %283 = vmatpush1.msra.mxu0 0.0
    %284 = vmatprep.subr.mxu0 0.0
    %285 = vmatpush1.msra.mxu0 0.0
    %286 = vmatprep.subr.mxu0 0.0
    %287 = vmatpush1.msra.mxu0 0.0
    %288 = vmatprep.subr.mxu0 0.0
    %289 = vmatpush1.msra.mxu0 0.0
    %290 = vmatprep.subr.mxu0 0.0
    %291 = vmatpush1.msra.mxu0 0.0
    %292 = vmatprep.subr.mxu0 0.0
    %293 = vmatpush1.msra.mxu0 0.0
    %294 = vmatprep.subr.mxu0 0.0
    %295 = vmatpush1.msra.mxu0 0.0
    %296 = vmatprep.subr.mxu0 0.0
    %297 = vmatpush1.msra.mxu0 0.0
    %298 = vmatprep.subr.mxu0 0.0
    %299 = vmatpush1.msra.mxu0 0.0
    %300 = vmatprep.subr.mxu0 0.0
    %301 = vmatpush1.msra.mxu0 0.0
    %302 = vmatprep.subr.mxu0 0.0
    %303 = vmatpush1.msra.mxu0 0.0
    %304 = vmatprep.subr.mxu0 0.0
    %305 = vmatpush1.msra.mxu0 0.0
    %306 = vmatprep.subr.mxu0 0.0
    %307 = vmatpush1.msra.mxu0 0.0
    %308 = vmatprep.subr.mxu0 0.0
    %309 = vmatpush1.msra.mxu0 0.0
    %310 = vmatprep.subr.mxu0 0.0
    %311 = vmatpush1.msra.mxu0 0.0
    %312 = vmatprep.subr.mxu0 0.0
    %313 = vmatpush1.msra.mxu0 0.0
    %314 = vmatprep.subr.mxu0 0.0
    %315 = vmatpush1.msra.mxu0 0.0
    %316 = vmatprep.subr.mxu0 0.0
    %317 = vmatpush1.msra.mxu0 0.0
    %318 = vmatprep.subr.mxu0 0.0
    %319 = vmatpush1.msra.mxu0 0.0
    %320 = vmatprep.subr.mxu0 0.0
    %321 = vmatpush1.msra.mxu0 0.0
    %322 = vmatprep.mubr.f32.mxu0 0.0
    %323 = vmatmul.mubr.f32.gmra.mrb[0].mxu0 %v250
    %v324 = vpop.f32.mrb[0].mxu0
    %v325 = vadd.f32 0.0, %v324
    %v326 = vpop.f32.mrb[0].mxu0
    %v327 = vadd.f32 0.0, %v326
    %328 = vdwg.mxu0
    %v329 = vadd.f32 %v226, %v325
    %v330 = vadd.f32 %v228, %v327
    %331 = vrot.lane.b32.xlu0 %v23, 1
    %v332 = vpop.permute.xlu0 %331
    %333 = vrot.lane.b32.xlu0 %v25, 1
    %v334 = vpop.permute.xlu0 %333
    %vm335 = vcmp.lt.s32.totalorder %v34, 1
    %v336 = vsel %vm335, %v332, %v334
    %v337 = vsel %vm335, %v334, %v332
    %v338 = vlaneseq
    %v339 = vshrl.u32 %v338, 7
    %v340 = vsub.s32 3, %v339
    %v341 = vrot.slane %v18, %v340
    %v342 = vlaneseq
    %v343 = vshrl.u32 %v342, 7
    %v344 = vsub.s32 3, %v343
    %v345 = vrot.slane %v19, %v344
    %v346 = vmul.f32 %v337, %v341
    %v347 = vmul.f32 %v336, %v345
    %s348 = scalar_lea.vmem %s2, 12
    %v349 = vld [vmem:[%s348] sm:$0xf]
    %v351 = vsel %vm68, %v349, 0
    %v354 = vsel %vm72, %v346, 0
    %v357 = vsel %vm72, %v347, 0
    %359 = vmatprep.subr.mxu0 %v357
    %360 = vmatpush1.msra.mxu0 %v354
    %361 = vmatprep.subr.mxu0 0.0
    %362 = vmatpush1.msra.mxu0 0.0
    %363 = vmatprep.subr.mxu0 0.0
    %364 = vmatpush1.msra.mxu0 0.0
    %365 = vmatprep.subr.mxu0 0.0
    %366 = vmatpush1.msra.mxu0 0.0
    %367 = vmatprep.subr.mxu0 0.0
    %368 = vmatpush1.msra.mxu0 0.0
    %369 = vmatprep.subr.mxu0 0.0
    %370 = vmatpush1.msra.mxu0 0.0
    %371 = vmatprep.subr.mxu0 0.0
    %372 = vmatpush1.msra.mxu0 0.0
    %373 = vmatprep.subr.mxu0 0.0
    %374 = vmatpush1.msra.mxu0 0.0
    %375 = vmatprep.subr.mxu0 0.0
    %376 = vmatpush1.msra.mxu0 0.0
    %377 = vmatprep.subr.mxu0 0.0
    %378 = vmatpush1.msra.mxu0 0.0
    %379 = vmatprep.subr.mxu0 0.0
    %380 = vmatpush1.msra.mxu0 0.0
    %381 = vmatprep.subr.mxu0 0.0
    %382 = vmatpush1.msra.mxu0 0.0
    %383 = vmatprep.subr.mxu0 0.0
    %384 = vmatpush1.msra.mxu0 0.0
    %385 = vmatprep.subr.mxu0 0.0
    %386 = vmatpush1.msra.mxu0 0.0
    %387 = vmatprep.subr.mxu0 0.0
    %388 = vmatpush1.msra.mxu0 0.0
    %389 = vmatprep.subr.mxu0 0.0
    %390 = vmatpush1.msra.mxu0 0.0
    %391 = vmatprep.subr.mxu0 0.0
    %392 = vmatpush1.msra.mxu0 0.0
    %393 = vmatprep.subr.mxu0 0.0
    %394 = vmatpush1.msra.mxu0 0.0
    %395 = vmatprep.subr.mxu0 0.0
    %396 = vmatpush1.msra.mxu0 0.0
    %397 = vmatprep.subr.mxu0 0.0
    %398 = vmatpush1.msra.mxu0 0.0
    %399 = vmatprep.subr.mxu0 0.0
    %400 = vmatpush1.msra.mxu0 0.0
    %401 = vmatprep.subr.mxu0 0.0
    %402 = vmatpush1.msra.mxu0 0.0
    %403 = vmatprep.subr.mxu0 0.0
    %404 = vmatpush1.msra.mxu0 0.0
    %405 = vmatprep.subr.mxu0 0.0
    %406 = vmatpush1.msra.mxu0 0.0
    %407 = vmatprep.subr.mxu0 0.0
    %408 = vmatpush1.msra.mxu0 0.0
    %409 = vmatprep.subr.mxu0 0.0
    %410 = vmatpush1.msra.mxu0 0.0
    %411 = vmatprep.subr.mxu0 0.0
    %412 = vmatpush1.msra.mxu0 0.0
    %413 = vmatprep.subr.mxu0 0.0
    %414 = vmatpush1.msra.mxu0 0.0
    %415 = vmatprep.subr.mxu0 0.0
    %416 = vmatpush1.msra.mxu0 0.0
    %417 = vmatprep.subr.mxu0 0.0
    %418 = vmatpush1.msra.mxu0 0.0
    %419 = vmatprep.subr.mxu0 0.0
    %420 = vmatpush1.msra.mxu0 0.0
    %421 = vmatprep.subr.mxu0 0.0
    %422 = vmatpush1.msra.mxu0 0.0
    %423 = vmatprep.mubr.f32.mxu0 0.0
    %424 = vmatmul.mubr.f32.gmra.mrb[0].mxu0 %v351
    %v425 = vpop.f32.mrb[0].mxu0
    %v426 = vadd.f32 0.0, %v425
    %v427 = vpop.f32.mrb[0].mxu0
    %v428 = vadd.f32 0.0, %v427
    %429 = vdwg.mxu0
    %v430 = vadd.f32 %v329, %v426
    %v431 = vadd.f32 %v330, %v428
    %s432 = scalar_lea.vmem %s2, 16
    %v433 = vld [vmem:[%s432] sm:$0xf]
    %v435 = vsel %vm68, %v433, 0
    %v437 = vsel %vm72, %v23, 0
    %v439 = vsel %vm72, %v25, 0
    %441 = vmatprep.subr.mxu0 %v439
    %442 = vmatpush1.msra.mxu0 %v437
    %443 = vmatprep.subr.mxu0 0.0
    %444 = vmatpush1.msra.mxu0 0.0
    %445 = vmatprep.subr.mxu0 0.0
    %446 = vmatpush1.msra.mxu0 0.0
    %447 = vmatprep.subr.mxu0 0.0
    %448 = vmatpush1.msra.mxu0 0.0
    %449 = vmatprep.subr.mxu0 0.0
    %450 = vmatpush1.msra.mxu0 0.0
    %451 = vmatprep.subr.mxu0 0.0
    %452 = vmatpush1.msra.mxu0 0.0
    %453 = vmatprep.subr.mxu0 0.0
    %454 = vmatpush1.msra.mxu0 0.0
    %455 = vmatprep.subr.mxu0 0.0
    %456 = vmatpush1.msra.mxu0 0.0
    %457 = vmatprep.subr.mxu0 0.0
    %458 = vmatpush1.msra.mxu0 0.0
    %459 = vmatprep.subr.mxu0 0.0
    %460 = vmatpush1.msra.mxu0 0.0
    %461 = vmatprep.subr.mxu0 0.0
    %462 = vmatpush1.msra.mxu0 0.0
    %463 = vmatprep.subr.mxu0 0.0
    %464 = vmatpush1.msra.mxu0 0.0
    %465 = vmatprep.subr.mxu0 0.0
    %466 = vmatpush1.msra.mxu0 0.0
    %467 = vmatprep.subr.mxu0 0.0
    %468 = vmatpush1.msra.mxu0 0.0
    %469 = vmatprep.subr.mxu0 0.0
    %470 = vmatpush1.msra.mxu0 0.0
    %471 = vmatprep.subr.mxu0 0.0
    %472 = vmatpush1.msra.mxu0 0.0
    %473 = vmatprep.subr.mxu0 0.0
    %474 = vmatpush1.msra.mxu0 0.0
    %475 = vmatprep.subr.mxu0 0.0
    %476 = vmatpush1.msra.mxu0 0.0
    %477 = vmatprep.subr.mxu0 0.0
    %478 = vmatpush1.msra.mxu0 0.0
    %479 = vmatprep.subr.mxu0 0.0
    %480 = vmatpush1.msra.mxu0 0.0
    %481 = vmatprep.subr.mxu0 0.0
    %482 = vmatpush1.msra.mxu0 0.0
    %483 = vmatprep.subr.mxu0 0.0
    %484 = vmatpush1.msra.mxu0 0.0
    %485 = vmatprep.subr.mxu0 0.0
    %486 = vmatpush1.msra.mxu0 0.0
    %487 = vmatprep.subr.mxu0 0.0
    %488 = vmatpush1.msra.mxu0 0.0
    %489 = vmatprep.subr.mxu0 0.0
    %490 = vmatpush1.msra.mxu0 0.0
    %491 = vmatprep.subr.mxu0 0.0
    %492 = vmatpush1.msra.mxu0 0.0
    %493 = vmatprep.subr.mxu0 0.0
    %494 = vmatpush1.msra.mxu0 0.0
    %495 = vmatprep.subr.mxu0 0.0
    %496 = vmatpush1.msra.mxu0 0.0
    %497 = vmatprep.subr.mxu0 0.0
    %498 = vmatpush1.msra.mxu0 0.0
    %499 = vmatprep.subr.mxu0 0.0
    %500 = vmatpush1.msra.mxu0 0.0
    %501 = vmatprep.subr.mxu0 0.0
    %502 = vmatpush1.msra.mxu0 0.0
    %503 = vmatprep.subr.mxu0 0.0
    %504 = vmatpush1.msra.mxu0 0.0
    %505 = vmatprep.mubr.f32.mxu0 0.0
    %506 = vmatmul.mubr.f32.gmra.mrb[0].mxu0 %v435
    %v507 = vpop.f32.mrb[0].mxu0
    %v508 = vadd.f32 0.0, %v507
    %v509 = vpop.f32.mrb[0].mxu0
    %v510 = vadd.f32 0.0, %v509
    %511 = vdwg.mxu0
    %v512 = vadd.f32 %v430, %v508
    %v513 = vadd.f32 %v431, %v510
    %514 = vrot.lane.b32.xlu0 %v23, 127
    %v515 = vpop.permute.xlu0 %514
    %516 = vrot.lane.b32.xlu0 %v25, 127
    %v517 = vpop.permute.xlu0 %516
    %vm518 = vcmp.lt.s32.totalorder %v34, 127
    %v519 = vsel %vm518, %v515, %v517
    %v520 = vsel %vm518, %v517, %v515
    %v521 = vlaneseq
    %v522 = vshrl.u32 %v521, 7
    %v523 = vsub.s32 5, %v522
    %v524 = vrot.slane %v18, %v523
    %v525 = vlaneseq
    %v526 = vshrl.u32 %v525, 7
    %v527 = vsub.s32 5, %v526
    %v528 = vrot.slane %v19, %v527
    %v529 = vmul.f32 %v519, %v524
    %v530 = vmul.f32 %v520, %v528
    %s531 = scalar_lea.vmem %s2, 20
    %v532 = vld [vmem:[%s531] sm:$0xf]
    %v534 = vsel %vm68, %v532, 0
    %v537 = vsel %vm72, %v529, 0
    %v540 = vsel %vm72, %v530, 0
    %542 = vmatprep.subr.mxu0 %v540
    %543 = vmatpush1.msra.mxu0 %v537
    %544 = vmatprep.subr.mxu0 0.0
    %545 = vmatpush1.msra.mxu0 0.0
    %546 = vmatprep.subr.mxu0 0.0
    %547 = vmatpush1.msra.mxu0 0.0
    %548 = vmatprep.subr.mxu0 0.0
    %549 = vmatpush1.msra.mxu0 0.0
    %550 = vmatprep.subr.mxu0 0.0
    %551 = vmatpush1.msra.mxu0 0.0
    %552 = vmatprep.subr.mxu0 0.0
    %553 = vmatpush1.msra.mxu0 0.0
    %554 = vmatprep.subr.mxu0 0.0
    %555 = vmatpush1.msra.mxu0 0.0
    %556 = vmatprep.subr.mxu0 0.0
    %557 = vmatpush1.msra.mxu0 0.0
    %558 = vmatprep.subr.mxu0 0.0
    %559 = vmatpush1.msra.mxu0 0.0
    %560 = vmatprep.subr.mxu0 0.0
    %561 = vmatpush1.msra.mxu0 0.0
    %562 = vmatprep.subr.mxu0 0.0
    %563 = vmatpush1.msra.mxu0 0.0
    %564 = vmatprep.subr.mxu0 0.0
    %565 = vmatpush1.msra.mxu0 0.0
    %566 = vmatprep.subr.mxu0 0.0
    %567 = vmatpush1.msra.mxu0 0.0
    %568 = vmatprep.subr.mxu0 0.0
    %569 = vmatpush1.msra.mxu0 0.0
    %570 = vmatprep.subr.mxu0 0.0
    %571 = vmatpush1.msra.mxu0 0.0
    %572 = vmatprep.subr.mxu0 0.0
    %573 = vmatpush1.msra.mxu0 0.0
    %574 = vmatprep.subr.mxu0 0.0
    %575 = vmatpush1.msra.mxu0 0.0
    %576 = vmatprep.subr.mxu0 0.0
    %577 = vmatpush1.msra.mxu0 0.0
    %578 = vmatprep.subr.mxu0 0.0
    %579 = vmatpush1.msra.mxu0 0.0
    %580 = vmatprep.subr.mxu0 0.0
    %581 = vmatpush1.msra.mxu0 0.0
    %582 = vmatprep.subr.mxu0 0.0
    %583 = vmatpush1.msra.mxu0 0.0
    %584 = vmatprep.subr.mxu0 0.0
    %585 = vmatpush1.msra.mxu0 0.0
    %586 = vmatprep.subr.mxu0 0.0
    %587 = vmatpush1.msra.mxu0 0.0
    %588 = vmatprep.subr.mxu0 0.0
    %589 = vmatpush1.msra.mxu0 0.0
    %590 = vmatprep.subr.mxu0 0.0
    %591 = vmatpush1.msra.mxu0 0.0
    %592 = vmatprep.subr.mxu0 0.0
    %593 = vmatpush1.msra.mxu0 0.0
    %594 = vmatprep.subr.mxu0 0.0
    %595 = vmatpush1.msra.mxu0 0.0
    %596 = vmatprep.subr.mxu0 0.0
    %597 = vmatpush1.msra.mxu0 0.0
    %598 = vmatprep.subr.mxu0 0.0
    %599 = vmatpush1.msra.mxu0 0.0
    %600 = vmatprep.subr.mxu0 0.0
    %601 = vmatpush1.msra.mxu0 0.0
    %602 = vmatprep.subr.mxu0 0.0
    %603 = vmatpush1.msra.mxu0 0.0
    %604 = vmatprep.subr.mxu0 0.0
    %605 = vmatpush1.msra.mxu0 0.0
    %606 = vmatprep.mubr.f32.mxu0 0.0
    %607 = vmatmul.mubr.f32.gmra.mrb[0].mxu0 %v534
    %v608 = vpop.f32.mrb[0].mxu0
    %v609 = vadd.f32 0.0, %v608
    %v610 = vpop.f32.mrb[0].mxu0
    %v611 = vadd.f32 0.0, %v610
    %612 = vdwg.mxu0
    %v613 = vadd.f32 %v512, %v609
    %v614 = vadd.f32 %v513, %v611
    %615 = vrot.lane.b32.xlu0 %v23, 113
    %v616 = vpop.permute.xlu0 %615
    %617 = vrot.lane.b32.xlu0 %v25, 113
    %v618 = vpop.permute.xlu0 %617
    %vm619 = vcmp.lt.s32.totalorder %v34, 113
    %v620 = vsel %vm619, %v616, %v618
    %v621 = vsel %vm619, %v618, %v616
    %v622 = vlaneseq
    %v623 = vshrl.u32 %v622, 7
    %v624 = vsub.s32 6, %v623
    %v625 = vrot.slane %v18, %v624
    %v626 = vlaneseq
    %v627 = vshrl.u32 %v626, 7
    %v628 = vsub.s32 6, %v627
    %v629 = vrot.slane %v19, %v628
    %v630 = vmul.f32 %v620, %v625
    %v631 = vmul.f32 %v621, %v629
    %s632 = scalar_lea.vmem %s2, 24
    %v633 = vld [vmem:[%s632] sm:$0xf]
    %v635 = vsel %vm68, %v633, 0
    %v638 = vsel %vm72, %v630, 0
    %v641 = vsel %vm72, %v631, 0
    %643 = vmatprep.subr.mxu0 %v641
    %644 = vmatpush1.msra.mxu0 %v638
    %645 = vmatprep.subr.mxu0 0.0
    %646 = vmatpush1.msra.mxu0 0.0
    %647 = vmatprep.subr.mxu0 0.0
    %648 = vmatpush1.msra.mxu0 0.0
    %649 = vmatprep.subr.mxu0 0.0
    %650 = vmatpush1.msra.mxu0 0.0
    %651 = vmatprep.subr.mxu0 0.0
    %652 = vmatpush1.msra.mxu0 0.0
    %653 = vmatprep.subr.mxu0 0.0
    %654 = vmatpush1.msra.mxu0 0.0
    %655 = vmatprep.subr.mxu0 0.0
    %656 = vmatpush1.msra.mxu0 0.0
    %657 = vmatprep.subr.mxu0 0.0
    %658 = vmatpush1.msra.mxu0 0.0
    %659 = vmatprep.subr.mxu0 0.0
    %660 = vmatpush1.msra.mxu0 0.0
    %661 = vmatprep.subr.mxu0 0.0
    %662 = vmatpush1.msra.mxu0 0.0
    %663 = vmatprep.subr.mxu0 0.0
    %664 = vmatpush1.msra.mxu0 0.0
    %665 = vmatprep.subr.mxu0 0.0
    %666 = vmatpush1.msra.mxu0 0.0
    %667 = vmatprep.subr.mxu0 0.0
    %668 = vmatpush1.msra.mxu0 0.0
    %669 = vmatprep.subr.mxu0 0.0
    %670 = vmatpush1.msra.mxu0 0.0
    %671 = vmatprep.subr.mxu0 0.0
    %672 = vmatpush1.msra.mxu0 0.0
    %673 = vmatprep.subr.mxu0 0.0
    %674 = vmatpush1.msra.mxu0 0.0
    %675 = vmatprep.subr.mxu0 0.0
    %676 = vmatpush1.msra.mxu0 0.0
    %677 = vmatprep.subr.mxu0 0.0
    %678 = vmatpush1.msra.mxu0 0.0
    %679 = vmatprep.subr.mxu0 0.0
    %680 = vmatpush1.msra.mxu0 0.0
    %681 = vmatprep.subr.mxu0 0.0
    %682 = vmatpush1.msra.mxu0 0.0
    %683 = vmatprep.subr.mxu0 0.0
    %684 = vmatpush1.msra.mxu0 0.0
    %685 = vmatprep.subr.mxu0 0.0
    %686 = vmatpush1.msra.mxu0 0.0
    %687 = vmatprep.subr.mxu0 0.0
    %688 = vmatpush1.msra.mxu0 0.0
    %689 = vmatprep.subr.mxu0 0.0
    %690 = vmatpush1.msra.mxu0 0.0
    %691 = vmatprep.subr.mxu0 0.0
    %692 = vmatpush1.msra.mxu0 0.0
    %693 = vmatprep.subr.mxu0 0.0
    %694 = vmatpush1.msra.mxu0 0.0
    %695 = vmatprep.subr.mxu0 0.0
    %696 = vmatpush1.msra.mxu0 0.0
    %697 = vmatprep.subr.mxu0 0.0
    %698 = vmatpush1.msra.mxu0 0.0
    %699 = vmatprep.subr.mxu0 0.0
    %700 = vmatpush1.msra.mxu0 0.0
    %701 = vmatprep.subr.mxu0 0.0
    %702 = vmatpush1.msra.mxu0 0.0
    %703 = vmatprep.subr.mxu0 0.0
    %704 = vmatpush1.msra.mxu0 0.0
    %705 = vmatprep.subr.mxu0 0.0
    %706 = vmatpush1.msra.mxu0 0.0
    %707 = vmatprep.mubr.f32.mxu0 0.0
    %708 = vmatmul.mubr.f32.gmra.mrb[0].mxu0 %v635
    %v709 = vpop.f32.mrb[0].mxu0
    %v710 = vadd.f32 0.0, %v709
    %v711 = vpop.f32.mrb[0].mxu0
    %v712 = vadd.f32 0.0, %v711
    %713 = vdwg.mxu0
    %v714 = vadd.f32 %v613, %v710
    %v715 = vadd.f32 %v614, %v712
    %716 = vrot.lane.b32.xlu0 %v23, 112
    %v717 = vpop.permute.xlu0 %716
    %718 = vrot.lane.b32.xlu0 %v25, 112
    %v719 = vpop.permute.xlu0 %718
    %vm720 = vcmp.lt.s32.totalorder %v34, 112
    %v721 = vsel %vm720, %v717, %v719
    %v722 = vsel %vm720, %v719, %v717
    %v723 = vlaneseq
    %v724 = vshrl.u32 %v723, 7
    %v725 = vsub.s32 7, %v724
    %v726 = vrot.slane %v18, %v725
    %v727 = vlaneseq
    %v728 = vshrl.u32 %v727, 7
    %v729 = vsub.s32 7, %v728
    %v730 = vrot.slane %v19, %v729
    %v731 = vmul.f32 %v721, %v726
    %v732 = vmul.f32 %v722, %v730
    %s733 = scalar_lea.vmem %s2, 28
    %v734 = vld [vmem:[%s733] sm:$0xf]
    %v736 = vsel %vm68, %v734, 0
    %v739 = vsel %vm72, %v731, 0
    %v742 = vsel %vm72, %v732, 0
    %744 = vmatprep.subr.mxu0 %v742
    %745 = vmatpush1.msra.mxu0 %v739
    %746 = vmatprep.subr.mxu0 0.0
    %747 = vmatpush1.msra.mxu0 0.0
    %748 = vmatprep.subr.mxu0 0.0
    %749 = vmatpush1.msra.mxu0 0.0
    %750 = vmatprep.subr.mxu0 0.0
    %751 = vmatpush1.msra.mxu0 0.0
    %752 = vmatprep.subr.mxu0 0.0
    %753 = vmatpush1.msra.mxu0 0.0
    %754 = vmatprep.subr.mxu0 0.0
    %755 = vmatpush1.msra.mxu0 0.0
    %756 = vmatprep.subr.mxu0 0.0
    %757 = vmatpush1.msra.mxu0 0.0
    %758 = vmatprep.subr.mxu0 0.0
    %759 = vmatpush1.msra.mxu0 0.0
    %760 = vmatprep.subr.mxu0 0.0
    %761 = vmatpush1.msra.mxu0 0.0
    %762 = vmatprep.subr.mxu0 0.0
    %763 = vmatpush1.msra.mxu0 0.0
    %764 = vmatprep.subr.mxu0 0.0
    %765 = vmatpush1.msra.mxu0 0.0
    %766 = vmatprep.subr.mxu0 0.0
    %767 = vmatpush1.msra.mxu0 0.0
    %768 = vmatprep.subr.mxu0 0.0
    %769 = vmatpush1.msra.mxu0 0.0
    %770 = vmatprep.subr.mxu0 0.0
    %771 = vmatpush1.msra.mxu0 0.0
    %772 = vmatprep.subr.mxu0 0.0
    %773 = vmatpush1.msra.mxu0 0.0
    %774 = vmatprep.subr.mxu0 0.0
    %775 = vmatpush1.msra.mxu0 0.0
    %776 = vmatprep.subr.mxu0 0.0
    %777 = vmatpush1.msra.mxu0 0.0
    %778 = vmatprep.subr.mxu0 0.0
    %779 = vmatpush1.msra.mxu0 0.0
    %780 = vmatprep.subr.mxu0 0.0
    %781 = vmatpush1.msra.mxu0 0.0
    %782 = vmatprep.subr.mxu0 0.0
    %783 = vmatpush1.msra.mxu0 0.0
    %784 = vmatprep.subr.mxu0 0.0
    %785 = vmatpush1.msra.mxu0 0.0
    %786 = vmatprep.subr.mxu0 0.0
    %787 = vmatpush1.msra.mxu0 0.0
    %788 = vmatprep.subr.mxu0 0.0
    %789 = vmatpush1.msra.mxu0 0.0
    %790 = vmatprep.subr.mxu0 0.0
    %791 = vmatpush1.msra.mxu0 0.0
    %792 = vmatprep.subr.mxu0 0.0
    %793 = vmatpush1.msra.mxu0 0.0
    %794 = vmatprep.subr.mxu0 0.0
    %795 = vmatpush1.msra.mxu0 0.0
    %796 = vmatprep.subr.mxu0 0.0
    %797 = vmatpush1.msra.mxu0 0.0
    %798 = vmatprep.subr.mxu0 0.0
    %799 = vmatpush1.msra.mxu0 0.0
    %800 = vmatprep.subr.mxu0 0.0
    %801 = vmatpush1.msra.mxu0 0.0
    %802 = vmatprep.subr.mxu0 0.0
    %803 = vmatpush1.msra.mxu0 0.0
    %804 = vmatprep.subr.mxu0 0.0
    %805 = vmatpush1.msra.mxu0 0.0
    %806 = vmatprep.subr.mxu0 0.0
    %807 = vmatpush1.msra.mxu0 0.0
    %808 = vmatprep.mubr.f32.mxu0 0.0
    %809 = vmatmul.mubr.f32.gmra.mrb[0].mxu0 %v736
    %v810 = vpop.f32.mrb[0].mxu0
    %v811 = vadd.f32 0.0, %v810
    %v812 = vpop.f32.mrb[0].mxu0
    %v813 = vadd.f32 0.0, %v812
    %814 = vdwg.mxu0
    %v815 = vadd.f32 %v714, %v811
    %v816 = vadd.f32 %v715, %v813
    %817 = vrot.lane.b32.xlu0 %v23, 111
    %v818 = vpop.permute.xlu0 %817
    %819 = vrot.lane.b32.xlu0 %v25, 111
    %v820 = vpop.permute.xlu0 %819
    %vm821 = vcmp.lt.s32.totalorder %v34, 111
    %v822 = vsel %vm821, %v818, %v820
    %v823 = vsel %vm821, %v820, %v818
    %v824 = vlaneseq
    %v825 = vshrl.u32 %v824, 7
    %v826 = vsub.s32 0, %v825
    %v827 = vrot.slane %v20, %v826
    %v828 = vlaneseq
    %v829 = vshrl.u32 %v828, 7
    %v830 = vsub.s32 0, %v829
    %v831 = vrot.slane %v21, %v830
    %v832 = vmul.f32 %v822, %v827
    %v833 = vmul.f32 %v823, %v831
    %s834 = scalar_lea.vmem %s2, 32
    %v835 = vld [vmem:[%s834] sm:$0xf]
    %v837 = vsel %vm68, %v835, 0
    %v840 = vsel %vm72, %v832, 0
    %v843 = vsel %vm72, %v833, 0
    %845 = vmatprep.subr.mxu0 %v843
    %846 = vmatpush1.msra.mxu0 %v840
    %847 = vmatprep.subr.mxu0 0.0
    %848 = vmatpush1.msra.mxu0 0.0
    %849 = vmatprep.subr.mxu0 0.0
    %850 = vmatpush1.msra.mxu0 0.0
    %851 = vmatprep.subr.mxu0 0.0
    %852 = vmatpush1.msra.mxu0 0.0
    %853 = vmatprep.subr.mxu0 0.0
    %854 = vmatpush1.msra.mxu0 0.0
    %855 = vmatprep.subr.mxu0 0.0
    %856 = vmatpush1.msra.mxu0 0.0
    %857 = vmatprep.subr.mxu0 0.0
    %858 = vmatpush1.msra.mxu0 0.0
    %859 = vmatprep.subr.mxu0 0.0
    %860 = vmatpush1.msra.mxu0 0.0
    %861 = vmatprep.subr.mxu0 0.0
    %862 = vmatpush1.msra.mxu0 0.0
    %863 = vmatprep.subr.mxu0 0.0
    %864 = vmatpush1.msra.mxu0 0.0
    %865 = vmatprep.subr.mxu0 0.0
    %866 = vmatpush1.msra.mxu0 0.0
    %867 = vmatprep.subr.mxu0 0.0
    %868 = vmatpush1.msra.mxu0 0.0
    %869 = vmatprep.subr.mxu0 0.0
    %870 = vmatpush1.msra.mxu0 0.0
    %871 = vmatprep.subr.mxu0 0.0
    %872 = vmatpush1.msra.mxu0 0.0
    %873 = vmatprep.subr.mxu0 0.0
    %874 = vmatpush1.msra.mxu0 0.0
    %875 = vmatprep.subr.mxu0 0.0
    %876 = vmatpush1.msra.mxu0 0.0
    %877 = vmatprep.subr.mxu0 0.0
    %878 = vmatpush1.msra.mxu0 0.0
    %879 = vmatprep.subr.mxu0 0.0
    %880 = vmatpush1.msra.mxu0 0.0
    %881 = vmatprep.subr.mxu0 0.0
    %882 = vmatpush1.msra.mxu0 0.0
    %883 = vmatprep.subr.mxu0 0.0
    %884 = vmatpush1.msra.mxu0 0.0
    %885 = vmatprep.subr.mxu0 0.0
    %886 = vmatpush1.msra.mxu0 0.0
    %887 = vmatprep.subr.mxu0 0.0
    %888 = vmatpush1.msra.mxu0 0.0
    %889 = vmatprep.subr.mxu0 0.0
    %890 = vmatpush1.msra.mxu0 0.0
    %891 = vmatprep.subr.mxu0 0.0
    %892 = vmatpush1.msra.mxu0 0.0
    %893 = vmatprep.subr.mxu0 0.0
    %894 = vmatpush1.msra.mxu0 0.0
    %895 = vmatprep.subr.mxu0 0.0
    %896 = vmatpush1.msra.mxu0 0.0
    %897 = vmatprep.subr.mxu0 0.0
    %898 = vmatpush1.msra.mxu0 0.0
    %899 = vmatprep.subr.mxu0 0.0
    %900 = vmatpush1.msra.mxu0 0.0
    %901 = vmatprep.subr.mxu0 0.0
    %902 = vmatpush1.msra.mxu0 0.0
    %903 = vmatprep.subr.mxu0 0.0
    %904 = vmatpush1.msra.mxu0 0.0
    %905 = vmatprep.subr.mxu0 0.0
    %906 = vmatpush1.msra.mxu0 0.0
    %907 = vmatprep.subr.mxu0 0.0
    %908 = vmatpush1.msra.mxu0 0.0
    %909 = vmatprep.mubr.f32.mxu0 0.0
    %910 = vmatmul.mubr.f32.gmra.mrb[0].mxu0 %v837
    %v911 = vpop.f32.mrb[0].mxu0
    %v912 = vadd.f32 0.0, %v911
    %v913 = vpop.f32.mrb[0].mxu0
    %v914 = vadd.f32 0.0, %v913
    %915 = vdwg.mxu0
    %v916 = vadd.f32 %v815, %v912
    %v917 = vadd.f32 %v816, %v914
    %919 = vset.pattern.permute.xlu0 0
    %920 = vperm.xlu0 %919, %v22
    %v921 = vpop.permute.xlu0 %920
    %v923 = vadd.f32 %v916, %v921
    %v924 = vadd.f32 %v917, %v921
    %v925 = vmax.f32 %v923, 0.0
    %v926 = vmax.f32 %v924, 0.0
    %v929 = vrot.slane %v925, 4
    %v930 = vrot.slane %v926, 4
    %933 = vst [vmem:[#allocation2] sm:$0xf0] %v929
    %934 = vst [vmem:[#allocation2 + $0x8] sm:$0xf0] %v930
    %s935 = scalar_lea.vmem %s1, 8
    %v936 = vld [vmem:[%s935] sm:$0xff]
    %v938 = vcombine.high %v936, %v936
    %s940 = scalar_lea.vmem [#allocation2], 16
    %941 = vst [vmem:[%s940] sm:$0xf] %v936
    %942 = vst [vmem:[%s940 + $0x8] sm:$0xf] %v938
    %943 = vrot.lane.b32.xlu0 %v936, 17
    %v944 = vpop.permute.xlu0 %943
    %945 = vrot.lane.b32.xlu0 %v938, 17
    %v946 = vpop.permute.xlu0 %945
    %v947 = vsel %vm35, %v944, %v946
    %v948 = vsel %vm35, %v946, %v944
    %v949 = vmul.f32 %v948, %v41
    %v950 = vmul.f32 %v947, %v45
    %v951 = vld [vmem:[%s2] sm:$0xf]
    %952 = vrot.lane.b32.xlu0 %v936, 16
    %v953 = vpop.permute.xlu0 %952
    %954 = vrot.lane.b32.xlu0 %v938, 16
    %v955 = vpop.permute.xlu0 %954
    %v956 = vsel %vm53, %v953, %v955
    %v957 = vsel %vm53, %v955, %v953
    %v958 = vmul.f32 %v957, %v59
    %v959 = vmul.f32 %v956, %v63
    %v960 = vld [vmem:[%s66] sm:$0xf]
    %v962 = vsel %vm68, %v960, 0
    %v965 = vsel %vm72, %v958, 0
    %v968 = vsel %vm72, %v959, 0
    %970 = vmatprep.subr.mxu0 %v968
    %971 = vmatpush1.msra.mxu0 %v965
    %972 = vmatprep.subr.mxu0 0.0
    %973 = vmatpush1.msra.mxu0 0.0
    %974 = vmatprep.subr.mxu0 0.0
    %975 = vmatpush1.msra.mxu0 0.0
    %976 = vmatprep.subr.mxu0 0.0
    %977 = vmatpush1.msra.mxu0 0.0
    %978 = vmatprep.subr.mxu0 0.0
    %979 = vmatpush1.msra.mxu0 0.0
    %980 = vmatprep.subr.mxu0 0.0
    %981 = vmatpush1.msra.mxu0 0.0
    %982 = vmatprep.subr.mxu0 0.0
    %983 = vmatpush1.msra.mxu0 0.0
    %984 = vmatprep.subr.mxu0 0.0
    %985 = vmatpush1.msra.mxu0 0.0
    %986 = vmatprep.subr.mxu0 0.0
    %987 = vmatpush1.msra.mxu0 0.0
    %988 = vmatprep.subr.mxu0 0.0
    %989 = vmatpush1.msra.mxu0 0.0
    %990 = vmatprep.subr.mxu0 0.0
    %991 = vmatpush1.msra.mxu0 0.0
    %992 = vmatprep.subr.mxu0 0.0
    %993 = vmatpush1.msra.mxu0 0.0
    %994 = vmatprep.subr.mxu0 0.0
    %995 = vmatpush1.msra.mxu0 0.0
    %996 = vmatprep.subr.mxu0 0.0
    %997 = vmatpush1.msra.mxu0 0.0
    %998 = vmatprep.subr.mxu0 0.0
    %999 = vmatpush1.msra.mxu0 0.0
    %1000 = vmatprep.subr.mxu0 0.0
    %1001 = vmatpush1.msra.mxu0 0.0
    %1002 = vmatprep.subr.mxu0 0.0
    %1003 = vmatpush1.msra.mxu0 0.0
    %1004 = vmatprep.subr.mxu0 0.0
    %1005 = vmatpush1.msra.mxu0 0.0
    %1006 = vmatprep.subr.mxu0 0.0
    %1007 = vmatpush1.msra.mxu0 0.0
    %1008 = vmatprep.subr.mxu0 0.0
    %1009 = vmatpush1.msra.mxu0 0.0
    %1010 = vmatprep.subr.mxu0 0.0
    %1011 = vmatpush1.msra.mxu0 0.0
    %1012 = vmatprep.subr.mxu0 0.0
    %1013 = vmatpush1.msra.mxu0 0.0
    %1014 = vmatprep.subr.mxu0 0.0
    %1015 = vmatpush1.msra.mxu0 0.0
    %1016 = vmatprep.subr.mxu0 0.0
    %1017 = vmatpush1.msra.mxu0 0.0
    %1018 = vmatprep.subr.mxu0 0.0
    %1019 = vmatpush1.msra.mxu0 0.0
    %1020 = vmatprep.subr.mxu0 0.0
    %1021 = vmatpush1.msra.mxu0 0.0
    %1022 = vmatprep.subr.mxu0 0.0
    %1023 = vmatpush1.msra.mxu0 0.0
    %1024 = vmatprep.subr.mxu0 0.0
    %1025 = vmatpush1.msra.mxu0 0.0
    %1026 = vmatprep.subr.mxu0 0.0
    %1027 = vmatpush1.msra.mxu0 0.0
    %1028 = vmatprep.subr.mxu0 0.0
    %1029 = vmatpush1.msra.mxu0 0.0
    %1030 = vmatprep.subr.mxu0 0.0
    %1031 = vmatpush1.msra.mxu0 0.0
    %1032 = vmatprep.subr.mxu0 0.0
    %1033 = vmatpush1.msra.mxu0 0.0
    %1034 = vmatprep.mubr.f32.mxu0 0.0
    %1035 = vmatmul.mubr.f32.gmra.mrb[0].mxu0 %v962
    %v1036 = vpop.f32.mrb[0].mxu0
    %v1037 = vadd.f32 0.0, %v1036
    %v1038 = vpop.f32.mrb[0].mxu0
    %v1039 = vadd.f32 0.0, %v1038
    %1040 = vdwg.mxu0
    %v1042 = vsel %vm68, %v951, 0
    %v1045 = vsel %vm72, %v949, 0
    %v1048 = vsel %vm72, %v950, 0
    %1050 = vmatprep.subr.mxu0 %v1048
    %1051 = vmatpush1.msra.mxu0 %v1045
    %1052 = vmatprep.subr.mxu0 0.0
    %1053 = vmatpush1.msra.mxu0 0.0
    %1054 = vmatprep.subr.mxu0 0.0
    %1055 = vmatpush1.msra.mxu0 0.0
    %1056 = vmatprep.subr.mxu0 0.0
    %1057 = vmatpush1.msra.mxu0 0.0
    %1058 = vmatprep.subr.mxu0 0.0
    %1059 = vmatpush1.msra.mxu0 0.0
    %1060 = vmatprep.subr.mxu0 0.0
    %1061 = vmatpush1.msra.mxu0 0.0
    %1062 = vmatprep.subr.mxu0 0.0
    %1063 = vmatpush1.msra.mxu0 0.0
    %1064 = vmatprep.subr.mxu0 0.0
    %1065 = vmatpush1.msra.mxu0 0.0
    %1066 = vmatprep.subr.mxu0 0.0
    %1067 = vmatpush1.msra.mxu0 0.0
    %1068 = vmatprep.subr.mxu0 0.0
    %1069 = vmatpush1.msra.mxu0 0.0
    %1070 = vmatprep.subr.mxu0 0.0
    %1071 = vmatpush1.msra.mxu0 0.0
    %1072 = vmatprep.subr.mxu0 0.0
    %1073 = vmatpush1.msra.mxu0 0.0
    %1074 = vmatprep.subr.mxu0 0.0
    %1075 = vmatpush1.msra.mxu0 0.0
    %1076 = vmatprep.subr.mxu0 0.0
    %1077 = vmatpush1.msra.mxu0 0.0
    %1078 = vmatprep.subr.mxu0 0.0
    %1079 = vmatpush1.msra.mxu0 0.0
    %1080 = vmatprep.subr.mxu0 0.0
    %1081 = vmatpush1.msra.mxu0 0.0
    %1082 = vmatprep.subr.mxu0 0.0
    %1083 = vmatpush1.msra.mxu0 0.0
    %1084 = vmatprep.subr.mxu0 0.0
    %1085 = vmatpush1.msra.mxu0 0.0
    %1086 = vmatprep.subr.mxu0 0.0
    %1087 = vmatpush1.msra.mxu0 0.0
    %1088 = vmatprep.subr.mxu0 0.0
    %1089 = vmatpush1.msra.mxu0 0.0
    %1090 = vmatprep.subr.mxu0 0.0
    %1091 = vmatpush1.msra.mxu0 0.0
    %1092 = vmatprep.subr.mxu0 0.0
    %1093 = vmatpush1.msra.mxu0 0.0
    %1094 = vmatprep.subr.mxu0 0.0
    %1095 = vmatpush1.msra.mxu0 0.0
    %1096 = vmatprep.subr.mxu0 0.0
    %1097 = vmatpush1.msra.mxu0 0.0
    %1098 = vmatprep.subr.mxu0 0.0
    %1099 = vmatpush1.msra.mxu0 0.0
    %1100 = vmatprep.subr.mxu0 0.0
    %1101 = vmatpush1.msra.mxu0 0.0
    %1102 = vmatprep.subr.mxu0 0.0
    %1103 = vmatpush1.msra.mxu0 0.0
    %1104 = vmatprep.subr.mxu0 0.0
    %1105 = vmatpush1.msra.mxu0 0.0
    %1106 = vmatprep.subr.mxu0 0.0
    %1107 = vmatpush1.msra.mxu0 0.0
    %1108 = vmatprep.subr.mxu0 0.0
    %1109 = vmatpush1.msra.mxu0 0.0
    %1110 = vmatprep.subr.mxu0 0.0
    %1111 = vmatpush1.msra.mxu0 0.0
    %1112 = vmatprep.subr.mxu0 0.0
    %1113 = vmatpush1.msra.mxu0 0.0
    %1114 = vmatprep.mubr.f32.mxu0 0.0
    %1115 = vmatmul.mubr.f32.gmra.mrb[0].mxu0 %v1042
    %v1116 = vpop.f32.mrb[0].mxu0
    %v1117 = vadd.f32 %v1037, %v1116
    %v1118 = vpop.f32.mrb[0].mxu0
    %v1119 = vadd.f32 %v1039, %v1118
    %1120 = vdwg.mxu0
    %1121 = vrot.lane.b32.xlu0 %v936, 15
    %v1122 = vpop.permute.xlu0 %1121
    %1123 = vrot.lane.b32.xlu0 %v938, 15
    %v1124 = vpop.permute.xlu0 %1123
    %v1125 = vsel %vm234, %v1122, %v1124
    %v1126 = vsel %vm234, %v1124, %v1122
    %v1127 = vmul.f32 %v1126, %v240
    %v1128 = vmul.f32 %v1125, %v244
    %v1129 = vld [vmem:[%s247] sm:$0xf]
    %v1131 = vsel %vm68, %v1129, 0
    %v1134 = vsel %vm72, %v1127, 0
    %v1137 = vsel %vm72, %v1128, 0
    %1139 = vmatprep.subr.mxu0 %v1137
    %1140 = vmatpush1.msra.mxu0 %v1134
    %1141 = vmatprep.subr.mxu0 0.0
    %1142 = vmatpush1.msra.mxu0 0.0
    %1143 = vmatprep.subr.mxu0 0.0
    %1144 = vmatpush1.msra.mxu0 0.0
    %1145 = vmatprep.subr.mxu0 0.0
    %1146 = vmatpush1.msra.mxu0 0.0
    %1147 = vmatprep.subr.mxu0 0.0
    %1148 = vmatpush1.msra.mxu0 0.0
    %1149 = vmatprep.subr.mxu0 0.0
    %1150 = vmatpush1.msra.mxu0 0.0
    %1151 = vmatprep.subr.mxu0 0.0
    %1152 = vmatpush1.msra.mxu0 0.0
    %1153 = vmatprep.subr.mxu0 0.0
    %1154 = vmatpush1.msra.mxu0 0.0
    %1155 = vmatprep.subr.mxu0 0.0
    %1156 = vmatpush1.msra.mxu0 0.0
    %1157 = vmatprep.subr.mxu0 0.0
    %1158 = vmatpush1.msra.mxu0 0.0
    %1159 = vmatprep.subr.mxu0 0.0
    %1160 = vmatpush1.msra.mxu0 0.0
    %1161 = vmatprep.subr.mxu0 0.0
    %1162 = vmatpush1.msra.mxu0 0.0
    %1163 = vmatprep.subr.mxu0 0.0
    %1164 = vmatpush1.msra.mxu0 0.0
    %1165 = vmatprep.subr.mxu0 0.0
    %1166 = vmatpush1.msra.mxu0 0.0
    %1167 = vmatprep.subr.mxu0 0.0
    %1168 = vmatpush1.msra.mxu0 0.0
    %1169 = vmatprep.subr.mxu0 0.0
    %1170 = vmatpush1.msra.mxu0 0.0
    %1171 = vmatprep.subr.mxu0 0.0
    %1172 = vmatpush1.msra.mxu0 0.0
    %1173 = vmatprep.subr.mxu0 0.0
    %1174 = vmatpush1.msra.mxu0 0.0
    %1175 = vmatprep.subr.mxu0 0.0
    %1176 = vmatpush1.msra.mxu0 0.0
    %1177 = vmatprep.subr.mxu0 0.0
    %1178 = vmatpush1.msra.mxu0 0.0
    %1179 = vmatprep.subr.mxu0 0.0
    %1180 = vmatpush1.msra.mxu0 0.0
    %1181 = vmatprep.subr.mxu0 0.0
    %1182 = vmatpush1.msra.mxu0 0.0
    %1183 = vmatprep.subr.mxu0 0.0
    %1184 = vmatpush1.msra.mxu0 0.0
    %1185 = vmatprep.subr.mxu0 0.0
    %1186 = vmatpush1.msra.mxu0 0.0
    %1187 = vmatprep.subr.mxu0 0.0
    %1188 = vmatpush1.msra.mxu0 0.0
    %1189 = vmatprep.subr.mxu0 0.0
    %1190 = vmatpush1.msra.mxu0 0.0
    %1191 = vmatprep.subr.mxu0 0.0
    %1192 = vmatpush1.msra.mxu0 0.0
    %1193 = vmatprep.subr.mxu0 0.0
    %1194 = vmatpush1.msra.mxu0 0.0
    %1195 = vmatprep.subr.mxu0 0.0
    %1196 = vmatpush1.msra.mxu0 0.0
    %1197 = vmatprep.subr.mxu0 0.0
    %1198 = vmatpush1.msra.mxu0 0.0
    %1199 = vmatprep.subr.mxu0 0.0
    %1200 = vmatpush1.msra.mxu0 0.0
    %1201 = vmatprep.subr.mxu0 0.0
    %1202 = vmatpush1.msra.mxu0 0.0
    %1203 = vmatprep.mubr.f32.mxu0 0.0
    %1204 = vmatmul.mubr.f32.gmra.mrb[0].mxu0 %v1131
    %v1205 = vpop.f32.mrb[0].mxu0
    %v1206 = vadd.f32 0.0, %v1205
    %v1207 = vpop.f32.mrb[0].mxu0
    %v1208 = vadd.f32 0.0, %v1207
    %1209 = vdwg.mxu0
    %v1210 = vadd.f32 %v1117, %v1206
    %v1211 = vadd.f32 %v1119, %v1208
    %1212 = vrot.lane.b32.xlu0 %v936, 1
    %v1213 = vpop.permute.xlu0 %1212
    %1214 = vrot.lane.b32.xlu0 %v938, 1
    %v1215 = vpop.permute.xlu0 %1214
    %v1216 = vsel %vm335, %v1213, %v1215
    %v1217 = vsel %vm335, %v1215, %v1213
    %v1218 = vmul.f32 %v1217, %v341
    %v1219 = vmul.f32 %v1216, %v345
    %v1220 = vld [vmem:[%s348] sm:$0xf]
    %v1222 = vsel %vm68, %v1220, 0
    %v1225 = vsel %vm72, %v1218, 0
    %v1228 = vsel %vm72, %v1219, 0
    %1230 = vmatprep.subr.mxu0 %v1228
    %1231 = vmatpush1.msra.mxu0 %v1225
    %1232 = vmatprep.subr.mxu0 0.0
    %1233 = vmatpush1.msra.mxu0 0.0
    %1234 = vmatprep.subr.mxu0 0.0
    %1235 = vmatpush1.msra.mxu0 0.0
    %1236 = vmatprep.subr.mxu0 0.0
    %1237 = vmatpush1.msra.mxu0 0.0
    %1238 = vmatprep.subr.mxu0 0.0
    %1239 = vmatpush1.msra.mxu0 0.0
    %1240 = vmatprep.subr.mxu0 0.0
    %1241 = vmatpush1.msra.mxu0 0.0
    %1242 = vmatprep.subr.mxu0 0.0
    %1243 = vmatpush1.msra.mxu0 0.0
    %1244 = vmatprep.subr.mxu0 0.0
    %1245 = vmatpush1.msra.mxu0 0.0
    %1246 = vmatprep.subr.mxu0 0.0
    %1247 = vmatpush1.msra.mxu0 0.0
    %1248 = vmatprep.subr.mxu0 0.0
    %1249 = vmatpush1.msra.mxu0 0.0
    %1250 = vmatprep.subr.mxu0 0.0
    %1251 = vmatpush1.msra.mxu0 0.0
    %1252 = vmatprep.subr.mxu0 0.0
    %1253 = vmatpush1.msra.mxu0 0.0
    %1254 = vmatprep.subr.mxu0 0.0
    %1255 = vmatpush1.msra.mxu0 0.0
    %1256 = vmatprep.subr.mxu0 0.0
    %1257 = vmatpush1.msra.mxu0 0.0
    %1258 = vmatprep.subr.mxu0 0.0
    %1259 = vmatpush1.msra.mxu0 0.0
    %1260 = vmatprep.subr.mxu0 0.0
    %1261 = vmatpush1.msra.mxu0 0.0
    %1262 = vmatprep.subr.mxu0 0.0
    %1263 = vmatpush1.msra.mxu0 0.0
    %1264 = vmatprep.subr.mxu0 0.0
    %1265 = vmatpush1.msra.mxu0 0.0
    %1266 = vmatprep.subr.mxu0 0.0
    %1267 = vmatpush1.msra.mxu0 0.0
    %1268 = vmatprep.subr.mxu0 0.0
    %1269 = vmatpush1.msra.mxu0 0.0
    %1270 = vmatprep.subr.mxu0 0.0
    %1271 = vmatpush1.msra.mxu0 0.0
    %1272 = vmatprep.subr.mxu0 0.0
    %1273 = vmatpush1.msra.mxu0 0.0
    %1274 = vmatprep.subr.mxu0 0.0
    %1275 = vmatpush1.msra.mxu0 0.0
    %1276 = vmatprep.subr.mxu0 0.0
    %1277 = vmatpush1.msra.mxu0 0.0
    %1278 = vmatprep.subr.mxu0 0.0
    %1279 = vmatpush1.msra.mxu0 0.0
    %1280 = vmatprep.subr.mxu0 0.0
    %1281 = vmatpush1.msra.mxu0 0.0
    %1282 = vmatprep.subr.mxu0 0.0
    %1283 = vmatpush1.msra.mxu0 0.0
    %1284 = vmatprep.subr.mxu0 0.0
    %1285 = vmatpush1.msra.mxu0 0.0
    %1286 = vmatprep.subr.mxu0 0.0
    %1287 = vmatpush1.msra.mxu0 0.0
    %1288 = vmatprep.subr.mxu0 0.0
    %1289 = vmatpush1.msra.mxu0 0.0
    %1290 = vmatprep.subr.mxu0 0.0
    %1291 = vmatpush1.msra.mxu0 0.0
    %1292 = vmatprep.subr.mxu0 0.0
    %1293 = vmatpush1.msra.mxu0 0.0
    %1294 = vmatprep.mubr.f32.mxu0 0.0
    %1295 = vmatmul.mubr.f32.gmra.mrb[0].mxu0 %v1222
    %v1296 = vpop.f32.mrb[0].mxu0
    %v1297 = vadd.f32 0.0, %v1296
    %v1298 = vpop.f32.mrb[0].mxu0
    %v1299 = vadd.f32 0.0, %v1298
    %1300 = vdwg.mxu0
    %v1301 = vadd.f32 %v1210, %v1297
    %v1302 = vadd.f32 %v1211, %v1299
    %v1303 = vld [vmem:[%s432] sm:$0xf]
    %v1305 = vsel %vm68, %v1303, 0
    %v1307 = vsel %vm72, %v936, 0
    %v1309 = vsel %vm72, %v938, 0
    %1311 = vmatprep.subr.mxu0 %v1309
    %1312 = vmatpush1.msra.mxu0 %v1307
    %1313 = vmatprep.subr.mxu0 0.0
    %1314 = vmatpush1.msra.mxu0 0.0
    %1315 = vmatprep.subr.mxu0 0.0
    %1316 = vmatpush1.msra.mxu0 0.0
    %1317 = vmatprep.subr.mxu0 0.0
    %1318 = vmatpush1.msra.mxu0 0.0
    %1319 = vmatprep.subr.mxu0 0.0
    %1320 = vmatpush1.msra.mxu0 0.0
    %1321 = vmatprep.subr.mxu0 0.0
    %1322 = vmatpush1.msra.mxu0 0.0
    %1323 = vmatprep.subr.mxu0 0.0
    %1324 = vmatpush1.msra.mxu0 0.0
    %1325 = vmatprep.subr.mxu0 0.0
    %1326 = vmatpush1.msra.mxu0 0.0
    %1327 = vmatprep.subr.mxu0 0.0
    %1328 = vmatpush1.msra.mxu0 0.0
    %1329 = vmatprep.subr.mxu0 0.0
    %1330 = vmatpush1.msra.mxu0 0.0
    %1331 = vmatprep.subr.mxu0 0.0
    %1332 = vmatpush1.msra.mxu0 0.0
    %1333 = vmatprep.subr.mxu0 0.0
    %1334 = vmatpush1.msra.mxu0 0.0
    %1335 = vmatprep.subr.mxu0 0.0
    %1336 = vmatpush1.msra.mxu0 0.0
    %1337 = vmatprep.subr.mxu0 0.0
    %1338 = vmatpush1.msra.mxu0 0.0
    %1339 = vmatprep.subr.mxu0 0.0
    %1340 = vmatpush1.msra.mxu0 0.0
    %1341 = vmatprep.subr.mxu0 0.0
    %1342 = vmatpush1.msra.mxu0 0.0
    %1343 = vmatprep.subr.mxu0 0.0
    %1344 = vmatpush1.msra.mxu0 0.0
    %1345 = vmatprep.subr.mxu0 0.0
    %1346 = vmatpush1.msra.mxu0 0.0
    %1347 = vmatprep.subr.mxu0 0.0
    %1348 = vmatpush1.msra.mxu0 0.0
    %1349 = vmatprep.subr.mxu0 0.0
    %1350 = vmatpush1.msra.mxu0 0.0
    %1351 = vmatprep.subr.mxu0 0.0
    %1352 = vmatpush1.msra.mxu0 0.0
    %1353 = vmatprep.subr.mxu0 0.0
    %1354 = vmatpush1.msra.mxu0 0.0
    %1355 = vmatprep.subr.mxu0 0.0
    %1356 = vmatpush1.msra.mxu0 0.0
    %1357 = vmatprep.subr.mxu0 0.0
    %1358 = vmatpush1.msra.mxu0 0.0
    %1359 = vmatprep.subr.mxu0 0.0
    %1360 = vmatpush1.msra.mxu0 0.0
    %1361 = vmatprep.subr.mxu0 0.0
    %1362 = vmatpush1.msra.mxu0 0.0
    %1363 = vmatprep.subr.mxu0 0.0
    %1364 = vmatpush1.msra.mxu0 0.0
    %1365 = vmatprep.subr.mxu0 0.0
    %1366 = vmatpush1.msra.mxu0 0.0
    %1367 = vmatprep.subr.mxu0 0.0
    %1368 = vmatpush1.msra.mxu0 0.0
    %1369 = vmatprep.subr.mxu0 0.0
    %1370 = vmatpush1.msra.mxu0 0.0
    %1371 = vmatprep.subr.mxu0 0.0
    %1372 = vmatpush1.msra.mxu0 0.0
    %1373 = vmatprep.subr.mxu0 0.0
    %1374 = vmatpush1.msra.mxu0 0.0
    %1375 = vmatprep.mubr.f32.mxu0 0.0
    %1376 = vmatmul.mubr.f32.gmra.mrb[0].mxu0 %v1305
    %v1377 = vpop.f32.mrb[0].mxu0
    %v1378 = vadd.f32 0.0, %v1377
    %v1379 = vpop.f32.mrb[0].mxu0
    %v1380 = vadd.f32 0.0, %v1379
    %1381 = vdwg.mxu0
    %v1382 = vadd.f32 %v1301, %v1378
    %v1383 = vadd.f32 %v1302, %v1380
    %1384 = vrot.lane.b32.xlu0 %v936, 127
    %v1385 = vpop.permute.xlu0 %1384
    %1386 = vrot.lane.b32.xlu0 %v938, 127
    %v1387 = vpop.permute.xlu0 %1386
    %v1388 = vsel %vm518, %v1385, %v1387
    %v1389 = vsel %vm518, %v1387, %v1385
    %v1390 = vmul.f32 %v1388, %v524
    %v1391 = vmul.f32 %v1389, %v528
    %v1392 = vld [vmem:[%s531] sm:$0xf]
    %v1394 = vsel %vm68, %v1392, 0
    %v1397 = vsel %vm72, %v1390, 0
    %v1400 = vsel %vm72, %v1391, 0
    %1402 = vmatprep.subr.mxu0 %v1400
    %1403 = vmatpush1.msra.mxu0 %v1397
    %1404 = vmatprep.subr.mxu0 0.0
    %1405 = vmatpush1.msra.mxu0 0.0
    %1406 = vmatprep.subr.mxu0 0.0
    %1407 = vmatpush1.msra.mxu0 0.0
    %1408 = vmatprep.subr.mxu0 0.0
    %1409 = vmatpush1.msra.mxu0 0.0
    %1410 = vmatprep.subr.mxu0 0.0
    %1411 = vmatpush1.msra.mxu0 0.0
    %1412 = vmatprep.subr.mxu0 0.0
    %1413 = vmatpush1.msra.mxu0 0.0
    %1414 = vmatprep.subr.mxu0 0.0
    %1415 = vmatpush1.msra.mxu0 0.0
    %1416 = vmatprep.subr.mxu0 0.0
    %1417 = vmatpush1.msra.mxu0 0.0
    %1418 = vmatprep.subr.mxu0 0.0
    %1419 = vmatpush1.msra.mxu0 0.0
    %1420 = vmatprep.subr.mxu0 0.0
    %1421 = vmatpush1.msra.mxu0 0.0
    %1422 = vmatprep.subr.mxu0 0.0
    %1423 = vmatpush1.msra.mxu0 0.0
    %1424 = vmatprep.subr.mxu0 0.0
    %1425 = vmatpush1.msra.mxu0 0.0
    %1426 = vmatprep.subr.mxu0 0.0
    %1427 = vmatpush1.msra.mxu0 0.0
    %1428 = vmatprep.subr.mxu0 0.0
    %1429 = vmatpush1.msra.mxu0 0.0
    %1430 = vmatprep.subr.mxu0 0.0
    %1431 = vmatpush1.msra.mxu0 0.0
    %1432 = vmatprep.subr.mxu0 0.0
    %1433 = vmatpush1.msra.mxu0 0.0
    %1434 = vmatprep.subr.mxu0 0.0
    %1435 = vmatpush1.msra.mxu0 0.0
    %1436 = vmatprep.subr.mxu0 0.0
    %1437 = vmatpush1.msra.mxu0 0.0
    %1438 = vmatprep.subr.mxu0 0.0
    %1439 = vmatpush1.msra.mxu0 0.0
    %1440 = vmatprep.subr.mxu0 0.0
    %1441 = vmatpush1.msra.mxu0 0.0
    %1442 = vmatprep.subr.mxu0 0.0
    %1443 = vmatpush1.msra.mxu0 0.0
    %1444 = vmatprep.subr.mxu0 0.0
    %1445 = vmatpush1.msra.mxu0 0.0
    %1446 = vmatprep.subr.mxu0 0.0
    %1447 = vmatpush1.msra.mxu0 0.0
    %1448 = vmatprep.subr.mxu0 0.0
    %1449 = vmatpush1.msra.mxu0 0.0
    %1450 = vmatprep.subr.mxu0 0.0
    %1451 = vmatpush1.msra.mxu0 0.0
    %1452 = vmatprep.subr.mxu0 0.0
    %1453 = vmatpush1.msra.mxu0 0.0
    %1454 = vmatprep.subr.mxu0 0.0
    %1455 = vmatpush1.msra.mxu0 0.0
    %1456 = vmatprep.subr.mxu0 0.0
    %1457 = vmatpush1.msra.mxu0 0.0
    %1458 = vmatprep.subr.mxu0 0.0
    %1459 = vmatpush1.msra.mxu0 0.0
    %1460 = vmatprep.subr.mxu0 0.0
    %1461 = vmatpush1.msra.mxu0 0.0
    %1462 = vmatprep.subr.mxu0 0.0
    %1463 = vmatpush1.msra.mxu0 0.0
    %1464 = vmatprep.subr.mxu0 0.0
    %1465 = vmatpush1.msra.mxu0 0.0
    %1466 = vmatprep.mubr.f32.mxu0 0.0
    %1467 = vmatmul.mubr.f32.gmra.mrb[0].mxu0 %v1394
    %v1468 = vpop.f32.mrb[0].mxu0
    %v1469 = vadd.f32 0.0, %v1468
    %v1470 = vpop.f32.mrb[0].mxu0
    %v1471 = vadd.f32 0.0, %v1470
    %1472 = vdwg.mxu0
    %v1473 = vadd.f32 %v1382, %v1469
    %v1474 = vadd.f32 %v1383, %v1471
    %1475 = vrot.lane.b32.xlu0 %v936, 113
    %v1476 = vpop.permute.xlu0 %1475
    %1477 = vrot.lane.b32.xlu0 %v938, 113
    %v1478 = vpop.permute.xlu0 %1477
    %v1479 = vsel %vm619, %v1476, %v1478
    %v1480 = vsel %vm619, %v1478, %v1476
    %v1481 = vmul.f32 %v1479, %v625
    %v1482 = vmul.f32 %v1480, %v629
    %v1483 = vld [vmem:[%s632] sm:$0xf]
    %v1485 = vsel %vm68, %v1483, 0
    %v1488 = vsel %vm72, %v1481, 0
    %v1491 = vsel %vm72, %v1482, 0
    %1493 = vmatprep.subr.mxu0 %v1491
    %1494 = vmatpush1.msra.mxu0 %v1488
    %1495 = vmatprep.subr.mxu0 0.0
    %1496 = vmatpush1.msra.mxu0 0.0
    %1497 = vmatprep.subr.mxu0 0.0
    %1498 = vmatpush1.msra.mxu0 0.0
    %1499 = vmatprep.subr.mxu0 0.0
    %1500 = vmatpush1.msra.mxu0 0.0
    %1501 = vmatprep.subr.mxu0 0.0
    %1502 = vmatpush1.msra.mxu0 0.0
    %1503 = vmatprep.subr.mxu0 0.0
    %1504 = vmatpush1.msra.mxu0 0.0
    %1505 = vmatprep.subr.mxu0 0.0
    %1506 = vmatpush1.msra.mxu0 0.0
    %1507 = vmatprep.subr.mxu0 0.0
    %1508 = vmatpush1.msra.mxu0 0.0
    %1509 = vmatprep.subr.mxu0 0.0
    %1510 = vmatpush1.msra.mxu0 0.0
    %1511 = vmatprep.subr.mxu0 0.0
    %1512 = vmatpush1.msra.mxu0 0.0
    %1513 = vmatprep.subr.mxu0 0.0
    %1514 = vmatpush1.msra.mxu0 0.0
    %1515 = vmatprep.subr.mxu0 0.0
    %1516 = vmatpush1.msra.mxu0 0.0
    %1517 = vmatprep.subr.mxu0 0.0
    %1518 = vmatpush1.msra.mxu0 0.0
    %1519 = vmatprep.subr.mxu0 0.0
    %1520 = vmatpush1.msra.mxu0 0.0
    %1521 = vmatprep.subr.mxu0 0.0
    %1522 = vmatpush1.msra.mxu0 0.0
    %1523 = vmatprep.subr.mxu0 0.0
    %1524 = vmatpush1.msra.mxu0 0.0
    %1525 = vmatprep.subr.mxu0 0.0
    %1526 = vmatpush1.msra.mxu0 0.0
    %1527 = vmatprep.subr.mxu0 0.0
    %1528 = vmatpush1.msra.mxu0 0.0
    %1529 = vmatprep.subr.mxu0 0.0
    %1530 = vmatpush1.msra.mxu0 0.0
    %1531 = vmatprep.subr.mxu0 0.0
    %1532 = vmatpush1.msra.mxu0 0.0
    %1533 = vmatprep.subr.mxu0 0.0
    %1534 = vmatpush1.msra.mxu0 0.0
    %1535 = vmatprep.subr.mxu0 0.0
    %1536 = vmatpush1.msra.mxu0 0.0
    %1537 = vmatprep.subr.mxu0 0.0
    %1538 = vmatpush1.msra.mxu0 0.0
    %1539 = vmatprep.subr.mxu0 0.0
    %1540 = vmatpush1.msra.mxu0 0.0
    %1541 = vmatprep.subr.mxu0 0.0
    %1542 = vmatpush1.msra.mxu0 0.0
    %1543 = vmatprep.subr.mxu0 0.0
    %1544 = vmatpush1.msra.mxu0 0.0
    %1545 = vmatprep.subr.mxu0 0.0
    %1546 = vmatpush1.msra.mxu0 0.0
    %1547 = vmatprep.subr.mxu0 0.0
    %1548 = vmatpush1.msra.mxu0 0.0
    %1549 = vmatprep.subr.mxu0 0.0
    %1550 = vmatpush1.msra.mxu0 0.0
    %1551 = vmatprep.subr.mxu0 0.0
    %1552 = vmatpush1.msra.mxu0 0.0
    %1553 = vmatprep.subr.mxu0 0.0
    %1554 = vmatpush1.msra.mxu0 0.0
    %1555 = vmatprep.subr.mxu0 0.0
    %1556 = vmatpush1.msra.mxu0 0.0
    %1557 = vmatprep.mubr.f32.mxu0 0.0
    %1558 = vmatmul.mubr.f32.gmra.mrb[0].mxu0 %v1485
    %v1559 = vpop.f32.mrb[0].mxu0
    %v1560 = vadd.f32 0.0, %v1559
    %v1561 = vpop.f32.mrb[0].mxu0
    %v1562 = vadd.f32 0.0, %v1561
    %1563 = vdwg.mxu0
    %v1564 = vadd.f32 %v1473, %v1560
    %v1565 = vadd.f32 %v1474, %v1562
    %1566 = vrot.lane.b32.xlu0 %v936, 112
    %v1567 = vpop.permute.xlu0 %1566
    %1568 = vrot.lane.b32.xlu0 %v938, 112
    %v1569 = vpop.permute.xlu0 %1568
    %v1570 = vsel %vm720, %v1567, %v1569
    %v1571 = vsel %vm720, %v1569, %v1567
    %v1572 = vmul.f32 %v1570, %v726
    %v1573 = vmul.f32 %v1571, %v730
    %v1574 = vld [vmem:[%s733] sm:$0xf]
    %v1576 = vsel %vm68, %v1574, 0
    %v1579 = vsel %vm72, %v1572, 0
    %v1582 = vsel %vm72, %v1573, 0
    %1584 = vmatprep.subr.mxu0 %v1582
    %1585 = vmatpush1.msra.mxu0 %v1579
    %1586 = vmatprep.subr.mxu0 0.0
    %1587 = vmatpush1.msra.mxu0 0.0
    %1588 = vmatprep.subr.mxu0 0.0
    %1589 = vmatpush1.msra.mxu0 0.0
    %1590 = vmatprep.subr.mxu0 0.0
    %1591 = vmatpush1.msra.mxu0 0.0
    %1592 = vmatprep.subr.mxu0 0.0
    %1593 = vmatpush1.msra.mxu0 0.0
    %1594 = vmatprep.subr.mxu0 0.0
    %1595 = vmatpush1.msra.mxu0 0.0
    %1596 = vmatprep.subr.mxu0 0.0
    %1597 = vmatpush1.msra.mxu0 0.0
    %1598 = vmatprep.subr.mxu0 0.0
    %1599 = vmatpush1.msra.mxu0 0.0
    %1600 = vmatprep.subr.mxu0 0.0
    %1601 = vmatpush1.msra.mxu0 0.0
    %1602 = vmatprep.subr.mxu0 0.0
    %1603 = vmatpush1.msra.mxu0 0.0
    %1604 = vmatprep.subr.mxu0 0.0
    %1605 = vmatpush1.msra.mxu0 0.0
    %1606 = vmatprep.subr.mxu0 0.0
    %1607 = vmatpush1.msra.mxu0 0.0
    %1608 = vmatprep.subr.mxu0 0.0
    %1609 = vmatpush1.msra.mxu0 0.0
    %1610 = vmatprep.subr.mxu0 0.0
    %1611 = vmatpush1.msra.mxu0 0.0
    %1612 = vmatprep.subr.mxu0 0.0
    %1613 = vmatpush1.msra.mxu0 0.0
    %1614 = vmatprep.subr.mxu0 0.0
    %1615 = vmatpush1.msra.mxu0 0.0
    %1616 = vmatprep.subr.mxu0 0.0
    %1617 = vmatpush1.msra.mxu0 0.0
    %1618 = vmatprep.subr.mxu0 0.0
    %1619 = vmatpush1.msra.mxu0 0.0
    %1620 = vmatprep.subr.mxu0 0.0
    %1621 = vmatpush1.msra.mxu0 0.0
    %1622 = vmatprep.subr.mxu0 0.0
    %1623 = vmatpush1.msra.mxu0 0.0
    %1624 = vmatprep.subr.mxu0 0.0
    %1625 = vmatpush1.msra.mxu0 0.0
    %1626 = vmatprep.subr.mxu0 0.0
    %1627 = vmatpush1.msra.mxu0 0.0
    %1628 = vmatprep.subr.mxu0 0.0
    %1629 = vmatpush1.msra.mxu0 0.0
    %1630 = vmatprep.subr.mxu0 0.0
    %1631 = vmatpush1.msra.mxu0 0.0
    %1632 = vmatprep.subr.mxu0 0.0
    %1633 = vmatpush1.msra.mxu0 0.0
    %1634 = vmatprep.subr.mxu0 0.0
    %1635 = vmatpush1.msra.mxu0 0.0
    %1636 = vmatprep.subr.mxu0 0.0
    %1637 = vmatpush1.msra.mxu0 0.0
    %1638 = vmatprep.subr.mxu0 0.0
    %1639 = vmatpush1.msra.mxu0 0.0
    %1640 = vmatprep.subr.mxu0 0.0
    %1641 = vmatpush1.msra.mxu0 0.0
    %1642 = vmatprep.subr.mxu0 0.0
    %1643 = vmatpush1.msra.mxu0 0.0
    %1644 = vmatprep.subr.mxu0 0.0
    %1645 = vmatpush1.msra.mxu0 0.0
    %1646 = vmatprep.subr.mxu0 0.0
    %1647 = vmatpush1.msra.mxu0 0.0
    %1648 = vmatprep.mubr.f32.mxu0 0.0
    %1649 = vmatmul.mubr.f32.gmra.mrb[0].mxu0 %v1576
    %v1650 = vpop.f32.mrb[0].mxu0
    %v1651 = vadd.f32 0.0, %v1650
    %v1652 = vpop.f32.mrb[0].mxu0
    %v1653 = vadd.f32 0.0, %v1652
    %1654 = vdwg.mxu0
    %v1655 = vadd.f32 %v1564, %v1651
    %v1656 = vadd.f32 %v1565, %v1653
    %1657 = vrot.lane.b32.xlu0 %v936, 111
    %v1658 = vpop.permute.xlu0 %1657
    %1659 = vrot.lane.b32.xlu0 %v938, 111
    %v1660 = vpop.permute.xlu0 %1659
    %v1661 = vsel %vm821, %v1658, %v1660
    %v1662 = vsel %vm821, %v1660, %v1658
    %v1663 = vmul.f32 %v1661, %v827
    %v1664 = vmul.f32 %v1662, %v831
    %v1665 = vld [vmem:[%s834] sm:$0xf]
    %v1667 = vsel %vm68, %v1665, 0
    %v1670 = vsel %vm72, %v1663, 0
    %v1673 = vsel %vm72, %v1664, 0
    %1675 = vmatprep.subr.mxu0 %v1673
    %1676 = vmatpush1.msra.mxu0 %v1670
    %1677 = vmatprep.subr.mxu0 0.0
    %1678 = vmatpush1.msra.mxu0 0.0
    %1679 = vmatprep.subr.mxu0 0.0
    %1680 = vmatpush1.msra.mxu0 0.0
    %1681 = vmatprep.subr.mxu0 0.0
    %1682 = vmatpush1.msra.mxu0 0.0
    %1683 = vmatprep.subr.mxu0 0.0
    %1684 = vmatpush1.msra.mxu0 0.0
    %1685 = vmatprep.subr.mxu0 0.0
    %1686 = vmatpush1.msra.mxu0 0.0
    %1687 = vmatprep.subr.mxu0 0.0
    %1688 = vmatpush1.msra.mxu0 0.0
    %1689 = vmatprep.subr.mxu0 0.0
    %1690 = vmatpush1.msra.mxu0 0.0
    %1691 = vmatprep.subr.mxu0 0.0
    %1692 = vmatpush1.msra.mxu0 0.0
    %1693 = vmatprep.subr.mxu0 0.0
    %1694 = vmatpush1.msra.mxu0 0.0
    %1695 = vmatprep.subr.mxu0 0.0
    %1696 = vmatpush1.msra.mxu0 0.0
    %1697 = vmatprep.subr.mxu0 0.0
    %1698 = vmatpush1.msra.mxu0 0.0
    %1699 = vmatprep.subr.mxu0 0.0
    %1700 = vmatpush1.msra.mxu0 0.0
    %1701 = vmatprep.subr.mxu0 0.0
    %1702 = vmatpush1.msra.mxu0 0.0
    %1703 = vmatprep.subr.mxu0 0.0
    %1704 = vmatpush1.msra.mxu0 0.0
    %1705 = vmatprep.subr.mxu0 0.0
    %1706 = vmatpush1.msra.mxu0 0.0
    %1707 = vmatprep.subr.mxu0 0.0
    %1708 = vmatpush1.msra.mxu0 0.0
    %1709 = vmatprep.subr.mxu0 0.0
    %1710 = vmatpush1.msra.mxu0 0.0
    %1711 = vmatprep.subr.mxu0 0.0
    %1712 = vmatpush1.msra.mxu0 0.0
    %1713 = vmatprep.subr.mxu0 0.0
    %1714 = vmatpush1.msra.mxu0 0.0
    %1715 = vmatprep.subr.mxu0 0.0
    %1716 = vmatpush1.msra.mxu0 0.0
    %1717 = vmatprep.subr.mxu0 0.0
    %1718 = vmatpush1.msra.mxu0 0.0
    %1719 = vmatprep.subr.mxu0 0.0
    %1720 = vmatpush1.msra.mxu0 0.0
    %1721 = vmatprep.subr.mxu0 0.0
    %1722 = vmatpush1.msra.mxu0 0.0
    %1723 = vmatprep.subr.mxu0 0.0
    %1724 = vmatpush1.msra.mxu0 0.0
    %1725 = vmatprep.subr.mxu0 0.0
    %1726 = vmatpush1.msra.mxu0 0.0
    %1727 = vmatprep.subr.mxu0 0.0
    %1728 = vmatpush1.msra.mxu0 0.0
    %1729 = vmatprep.subr.mxu0 0.0
    %1730 = vmatpush1.msra.mxu0 0.0
    %1731 = vmatprep.subr.mxu0 0.0
    %1732 = vmatpush1.msra.mxu0 0.0
    %1733 = vmatprep.subr.mxu0 0.0
    %1734 = vmatpush1.msra.mxu0 0.0
    %1735 = vmatprep.subr.mxu0 0.0
    %1736 = vmatpush1.msra.mxu0 0.0
    %1737 = vmatprep.subr.mxu0 0.0
    %1738 = vmatpush1.msra.mxu0 0.0
    %1739 = vmatprep.mubr.f32.mxu0 0.0
    %1740 = vmatmul.mubr.f32.gmra.mrb[0].mxu0 %v1667
    %v1741 = vpop.f32.mrb[0].mxu0
    %v1742 = vadd.f32 0.0, %v1741
    %v1743 = vpop.f32.mrb[0].mxu0
    %v1744 = vadd.f32 0.0, %v1743
    %1745 = vdwg.mxu0
    %v1746 = vadd.f32 %v1655, %v1742
    %v1747 = vadd.f32 %v1656, %v1744
    %v1748 = vadd.f32 %v1746, %v921
    %v1749 = vadd.f32 %v1747, %v921
    %v1750 = vmax.f32 %v1748, 0.0
    %v1751 = vmax.f32 %v1749, 0.0
    %v1754 = vrot.slane %v1750, 4
    %v1755 = vrot.slane %v1751, 4
    %1758 = vst [vmem:[%s940] sm:$0xf0] %v1754
    %1759 = vst [vmem:[%s940 + $0x8] sm:$0xf0] %v1755
    // Predicated region
    $region18: #{tpu_custom_call.1} parent=1 // pred_check
      _
    $region19: #{tpu_custom_call.1} parent=1 // pred_check_branch
      %1761 = sbr.rel (0) target = $region21
    $region20: #{tpu_custom_call.1} parent=1 // pred_region
      %s1763 = ssub.s32 512, 512
      %1764 = vsyncadd [#allocation3], %s1763
      %s1765 = sshll.u32 [#allocation2], 4
      %s1766 = int_to_ptr.vmem [resolvable:$true] %s1765
      %1771 = dma.vmem_to_hbm [thread:$0]  %s1766, 512, %s4, [#allocation3], 256, 256, 16
    $region21: #{tpu_custom_call.1} parent=1 // pred_fallthru
      _
    // Predicated region
    $region22: #{tpu_custom_call.1} parent=1 // pred_check
      _
    $region23: #{tpu_custom_call.1} parent=1 // pred_check_branch
      %1773 = sbr.rel (0) target = $region25
    $region24: #{tpu_custom_call.1} parent=1 // pred_region
      %1774 = dma.done [#allocation3], 512
    $region25: #{tpu_custom_call.1} parent=1 // pred_fallthru
      _
    %1775 = vsyncpa [#allocation3], 1

</llo_original>
